<compile_context>
chip_gen: v6e
topology: v6e:2x2x1
jax: 0.10.0
libtpu: 0.0.40
codegen_flags: <defaults>
</compile_context>

<pallas_src>
import math
import numpy as np
import jax
import jax.numpy as jnp
from jax import lax
from jax.experimental import pallas as pl
from jax.experimental.pallas import tpu as pltpu

_FILTER_SIZE = 13
_STD = 3.0
_SQRT2 = math.sqrt(2.0)
_TAN_22_5 = _SQRT2 - 1.0
_TAN_67_5 = _SQRT2 + 1.0

# directional_filter[k]: out = in(center) - in(center + offset_k)  (cross-corr)
_DIR_OFFSETS = ((0, 1), (1, 1), (1, 0), (1, -1), (0, -1), (-1, -1), (-1, 0), (-1, 1))


def _vmem_limit_bytes():
    """Scoped VMEM limit with headroom below physical capacity.

    ~48 MiB on v7x (64 MiB physical), ~112 MiB on v5e/v6e (128 MiB physical).
    """
    try:
        cap = int(pltpu.get_tpu_info().vmem_capacity_bytes)
    except Exception:
        cap = 64 * 1024 * 1024
    return max(32 * 1024 * 1024, min(cap - 16 * 1024 * 1024, 112 * 1024 * 1024))


def _gaussian_window(M, std):
    # matches scipy.signal.gaussian(M, std) used by get_state_dict (then f32 cast)
    n = np.arange(M, dtype=np.float64) - (M - 1) / 2.0
    return np.exp(-0.5 * (n / std) ** 2).astype(np.float32)


def _exact_lower_median(x):
    """torch.median semantics (lower median) without a full sort.

    32 counting passes (bitwise bisection on the order-preserving uint32 key)
    instead of an O(n log n) sort that would dominate wall clock at
    production sizes.  Exact, not approximate.
    """
    flat = x.reshape(-1).astype(jnp.float32)
    n = flat.size
    k = (n - 1) // 2  # 0-based rank of the lower median
    bits = lax.bitcast_convert_type(flat, jnp.uint32)
    neg = bits >= jnp.uint32(0x80000000)
    keys = jnp.where(neg, ~bits, bits | jnp.uint32(0x80000000))

    prefix = jnp.uint32(0)
    for i in range(31, -1, -1):
        cand = prefix | jnp.uint32(1 << i)
        cnt = jnp.sum((keys < cand).astype(jnp.int32))
        prefix = jnp.where(cnt >= k + 1, prefix, cand)

    med_bits = jnp.where(prefix >= jnp.uint32(0x80000000),
                         prefix ^ jnp.uint32(0x80000000), ~prefix)
    return lax.bitcast_convert_type(med_bits, jnp.float32)


# ----------------------------------------------------------------------------
# Stage 1: per-(batch, channel) separable Gaussian blur + Sobel gradients as
# shifted-window adds from one zero-padded VMEM plane (no dense matmuls).
# Channel accumulation of grad_x/grad_y in scratch and of grad_mag directly in
# the revisited output block; orientation sector (int8) emitted on last channel.
# ----------------------------------------------------------------------------
def _make_grad_kernel(g, half, P, H, W):
    n_taps = len(g)

    def kernel(img_ref, gm_ref, k_ref, pad_ref, gx_ref, gy_ref):
        c = pl.program_id(1)

        def win(dr, dc):
            return pad_ref[pl.ds(P + dr, H), pl.ds(P + dc, W)]

        def set_interior(val):
            pad_ref[pl.ds(P, H), pl.ds(P, W)] = val

        @pl.when(c == 0)
        def _():
            gx_ref[...] = jnp.zeros_like(gx_ref)
            gy_ref[...] = jnp.zeros_like(gy_ref)
            gm_ref[...] = jnp.zeros_like(gm_ref)
            # zero only the border strips of the padded plane; the interior is
            # always fully overwritten, so the borders stay zero afterwards.
            zr = jnp.zeros((P, W + 2 * P), jnp.float32)
            zc = jnp.zeros((H + 2 * P, P), jnp.float32)
            pad_ref[pl.ds(0, P), pl.ds(0, W + 2 * P)] = zr
            pad_ref[pl.ds(P + H, P), pl.ds(0, W + 2 * P)] = zr
            pad_ref[pl.ds(0, H + 2 * P), pl.ds(0, P)] = zc
            pad_ref[pl.ds(0, H + 2 * P), pl.ds(P + W, P)] = zc

        # ---- 13-tap Gaussian along W (zero padded) ----
        set_interior(img_ref[0, 0, :, :])
        bh = g[0] * win(0, -half)
        for t in range(1, n_taps):
            bh = bh + g[t] * win(0, t - half)

        # ---- 13-tap Gaussian along H (zero padded) ----
        set_interior(bh)
        bl = g[0] * win(-half, 0)
        for t in range(1, n_taps):
            bl = bl + g[t] * win(t - half, 0)

        # ---- 3x3 Sobels on the blurred channel (zero padded cross-corr) ----
        set_interior(bl)
        gxi = ((win(-1, -1) - win(-1, 1))
               + 2.0 * (win(0, -1) - win(0, 1))
               + (win(1, -1) - win(1, 1)))
        gyi = ((win(-1, -1) + 2.0 * win(-1, 0) + win(-1, 1))
               - (win(1, -1) + 2.0 * win(1, 0) + win(1, 1)))

        gx_ref[...] += gxi
        gy_ref[...] += gyi
        gm_ref[0, :, :] += jnp.sqrt(gxi * gxi + gyi * gyi)

        @pl.when(c == pl.num_programs(1) - 1)
        def _():
            gx = gx_ref[...]
            gy = gy_ref[...]
            # sector k = round((atan2(gy,gx)*180/pi + 180)/45) % 8 via
            # tan(22.5)/tan(67.5) comparisons (atan2 has no TPU lowering;
            # identical except exactly at the sector-boundary angles).
            ax = jnp.abs(gx)
            ay = jnp.abs(gy)
            horiz = ay < _TAN_22_5 * ax
            vert = ay > _TAN_67_5 * ax
            k_diag = jnp.where(gx > 0.0,
                               jnp.where(gy > 0.0, 5, 3),
                               jnp.where(gy > 0.0, 7, 1))
            kk = jnp.where(horiz, jnp.where(gx > 0.0, 4, 0),
                           jnp.where(vert, jnp.where(gy > 0.0, 6, 2), k_diag))
            kk = jnp.where((gx == 0.0) & (gy == 0.0), 4, kk)
            k_ref[0, :, :] = kk.astype(jnp.int8)

    return kernel


def _gradients(img, filter_size, std):
    B, C, H, W = img.shape
    g = [float(v) for v in _gaussian_window(filter_size, std)]
    half = filter_size // 2
    P = max(half, 1)   # minimal halo; lane-misaligned shifts are unavoidable anyway
    # TODO(synk): on v7x with B==1, add a spatial "parallel" grid axis (row
    # blocks with a (half+1)-row halo) so both TensorCores are used.
    return pl.pallas_call(
        _make_grad_kernel(g, half, P, H, W),
        grid=(B, C),
        in_specs=[pl.BlockSpec((1, 1, H, W), lambda b, c: (b, c, 0, 0))],
        out_specs=(
            pl.BlockSpec((1, H, W), lambda b, c: (b, 0, 0)),
            pl.BlockSpec((1, H, W), lambda b, c: (b, 0, 0)),
        ),
        out_shape=(
            jax.ShapeDtypeStruct((B, H, W), jnp.float32),  # grad_mag (sum over C)
            jax.ShapeDtypeStruct((B, H, W), jnp.int8),     # orientation sector
        ),
        scratch_shapes=[
            pltpu.VMEM((H + 2 * P, W + 2 * P), jnp.float32),  # padded work plane
            pltpu.VMEM((H, W), jnp.float32),                  # grad_x accumulator
            pltpu.VMEM((H, W), jnp.float32),                  # grad_y accumulator
        ],
        compiler_params=pltpu.CompilerParams(
            dimension_semantics=("parallel", "arbitrary"),
            vmem_limit_bytes=_vmem_limit_bytes()),
    )(img)


# ----------------------------------------------------------------------------
# Stage 2: NMS + hysteresis (loads/VPU only).  Directional and connect filters
# are zero-padded shifted-window reads of 1-pixel-padded VMEM scratch.
# Gridless because the reference's flat-buffer channel select mixes batches.
# ----------------------------------------------------------------------------
def _nms_hyst_kernel(thr_ref, gm_ref, k_ref, out_ref, gpad_ref, hpad_ref):
    B, H, W = gm_ref.shape
    low = thr_ref[0]
    high = thr_ref[1]

    # zero only the 1-px border rings of the padded scratches (interiors are
    # always fully overwritten); then fill grad_mag interiors for all batches.
    zrow = jnp.zeros((1, W + 2), jnp.float32)
    zcol = jnp.zeros((H + 2, 1), jnp.float32)
    for b in range(B):
        gpad_ref[b, pl.ds(0, 1), pl.ds(0, W + 2)] = zrow
        gpad_ref[b, pl.ds(H + 1, 1), pl.ds(0, W + 2)] = zrow
        gpad_ref[b, pl.ds(0, H + 2), pl.ds(0, 1)] = zcol
        gpad_ref[b, pl.ds(0, H + 2), pl.ds(W + 1, 1)] = zcol
        gpad_ref[b, pl.ds(1, H), pl.ds(1, W)] = gm_ref[b, :, :]
    hpad_ref[pl.ds(0, 1), pl.ds(0, W + 2)] = zrow
    hpad_ref[pl.ds(H + 1, 1), pl.ds(0, W + 2)] = zrow
    hpad_ref[pl.ds(0, H + 2), pl.ds(0, 1)] = zcol
    hpad_ref[pl.ds(0, H + 2), pl.ds(W + 1, 1)] = zcol

    kall = k_ref[...].astype(jnp.int32)   # int8 in HBM/VMEM, int32 for compute

    row = lax.broadcasted_iota(jnp.int32, (H, W), 0)
    col = lax.broadcasted_iota(jnp.int32, (H, W), 1)
    interior = (row > 0) & (row < H - 1) & (col > 0) & (col < W - 1)

    for b in range(B):
        kpos = kall[b]
        pos = jnp.zeros((H, W), jnp.float32)
        neg = jnp.zeros((H, W), jnp.float32)
        for kk in range(8):
            # reproduce the reference's flat-buffer gather exactly: flat index
            # kk*B*H*W + b*H*W + s into the [B, 8, H, W] directional-filter
            # output (this intentionally mixes batches, as in the PyTorch code).
            o2 = kk * B + b
            bb, kd = o2 // 8, o2 % 8
            di, dj = _DIR_OFFSETS[kd]
            src = (gm_ref[bb, :, :]
                   - gpad_ref[bb, pl.ds(1 + di, H), pl.ds(1 + dj, W)])
            pos = pos + jnp.where(kpos == kk, src, 0.0)
            neg = neg + jnp.where(kpos == (kk + 4) % 8, src, 0.0)

        gm = gm_ref[b, :, :]
        is_max = jnp.minimum(pos, neg) > 0.0
        thin = jnp.where(is_max, gm, 0.0)

        higher = thin > high
        hpad_ref[pl.ds(1, H), pl.ds(1, W)] = higher.astype(jnp.float32)
        # connect filter = 3x3 ring of ones = sum of the 8 neighbours (zero pad)
        connect = jnp.zeros((H, W), jnp.float32)
        for ddi in (-1, 0, 1):
            for ddj in (-1, 0, 1):
                if ddi == 0 and ddj == 0:
                    continue
                connect = connect + hpad_ref[pl.ds(1 + ddi, H),
                                             pl.ds(1 + ddj, W)]

        middle = (thin >= low) & (thin <= high)
        res = higher | (middle & (connect > 0.0))
        out_ref[b, 0, :, :] = (res & interior).astype(jnp.float32)


def _nms_hysteresis(thr, gm, k):
    B, H, W = gm.shape
    # TODO(synk): for production H,W pad W to a multiple of 128 (crop after) so
    # lane-dim stores are dense, and row-tile this stage with a 2-row halo to
    # bound VMEM and pipeline the HBM->VMEM DMA.
    return pl.pallas_call(
        _nms_hyst_kernel,
        out_shape=jax.ShapeDtypeStruct((B, 1, H, W), jnp.float32),
        in_specs=[
            pl.BlockSpec(memory_space=pltpu.MemorySpace.SMEM),   # [low, high]
            pl.BlockSpec(memory_space=pltpu.MemorySpace.VMEM),   # grad_mag [B,H,W] f32
            pl.BlockSpec(memory_space=pltpu.MemorySpace.VMEM),   # sector   [B,H,W] i8
        ],
        out_specs=pl.BlockSpec(memory_space=pltpu.MemorySpace.VMEM),
        scratch_shapes=[
            pltpu.VMEM((B, H + 2, W + 2), jnp.float32),   # padded grad_mag
            pltpu.VMEM((H + 2, W + 2), jnp.float32),      # padded "higher" map
        ],
        compiler_params=pltpu.CompilerParams(vmem_limit_bytes=_vmem_limit_bytes()),
    )(thr, gm, k)


def canny_detector(img, sigma=0.3, scale=6, filter_size=_FILTER_SIZE, std=_STD):
    img = img.astype(jnp.float32)
    B, C, H, W = img.shape

    # Global median (torch.median = lower median), exact, without a full sort.
    v = _exact_lower_median(img)
    t1 = jnp.maximum(0.0, (1.0 - sigma) * v) * scale
    t2 = jnp.minimum(1.0, (1.0 + sigma) * v) * scale
    thr = jnp.stack([jnp.minimum(t1, t2), jnp.maximum(t1, t2)]).astype(jnp.float32)

    gm, k = _gradients(img, filter_size, std)
    return _nms_hysteresis(thr, gm, k)


if __name__ == "__main__":
    key = jax.random.PRNGKey(0)
    B, C, H, W = 2, 4, 16, 16
    img = jax.random.uniform(key, (B, C, H, W), dtype=jnp.float32)
    out = jax.jit(canny_detector)(img)
    jax.block_until_ready(out)
    assert out.shape == (B, 1, H, W)
    assert out.dtype == jnp.float32
    print("KERNEL_OK")
</pallas_src>

<mosaic_0001>
module attributes {stable_mosaic.version = 11 : i64} {
  func.func @kernel(%arg0: i32, %arg1: i32, %arg2: memref<1x1x16x16xf32, #tpu.memory_space<vmem>>, %arg3: memref<1x16x16xf32, #tpu.memory_space<vmem>>, %arg4: memref<1x16x16xi8, #tpu.memory_space<vmem>>, %arg5: memref<28x28xf32, #tpu.memory_space<vmem>>, %arg6: memref<16x16xf32, #tpu.memory_space<vmem>>, %arg7: memref<16x16xf32, #tpu.memory_space<vmem>>) attributes {dimension_semantics = [#tpu.dimension_semantics<parallel>, #tpu.dimension_semantics<arbitrary>], iteration_bounds = array<i64: 2, 4>, scalar_prefetch = 0 : i64, scratch_operands = 3 : i64, tpu.core_type = #tpu.core_type<tc>, window_params = [{transform_indices = @transform_0, window_bounds = array<i64: 1, 1, 16, 16>}, {transform_indices = @transform_1, window_bounds = array<i64: 1, 16, 16>}, {transform_indices = @transform_2, window_bounds = array<i64: 1, 16, 16>}]} {
    %c0_i32 = arith.constant 0 : i32
    %0 = arith.cmpi eq, %arg1, %c0_i32 : i32
    %1 = arith.extui %0 : i1 to i32
    %c0_i32_0 = arith.constant 0 : i32
    %2 = arith.cmpi ne, %1, %c0_i32_0 : i32
    scf.if %2 {
      %cst_117 = arith.constant 0.000000e+00 : f32
      %157 = vector.broadcast %cst_117 : f32 to vector<16x16xf32>
      %c0_118 = arith.constant 0 : index
      %c0_119 = arith.constant 0 : index
      %158 = vector.load %arg6[%c0_118, %c0_119] : memref<16x16xf32, #tpu.memory_space<vmem>>, vector<16x16xf32>
      tpu.vector_store %arg6[%c0_118, %c0_119], %157 {strides = array<i32>} : memref<16x16xf32, #tpu.memory_space<vmem>>, vector<16x16xf32>,
      %cst_120 = arith.constant 0.000000e+00 : f32
      %159 = vector.broadcast %cst_120 : f32 to vector<16x16xf32>
      %c0_121 = arith.constant 0 : index
      %c0_122 = arith.constant 0 : index
      %160 = vector.load %arg7[%c0_121, %c0_122] : memref<16x16xf32, #tpu.memory_space<vmem>>, vector<16x16xf32>
      tpu.vector_store %arg7[%c0_121, %c0_122], %159 {strides = array<i32>} : memref<16x16xf32, #tpu.memory_space<vmem>>, vector<16x16xf32>,
      %cst_123 = arith.constant 0.000000e+00 : f32
      %161 = vector.broadcast %cst_123 : f32 to vector<1x16x16xf32>
      %c0_124 = arith.constant 0 : index
      %c0_125 = arith.constant 0 : index
      %c0_126 = arith.constant 0 : index
      %162 = vector.load %arg3[%c0_124, %c0_125, %c0_126] : memref<1x16x16xf32, #tpu.memory_space<vmem>>, vector<1x16x16xf32>
      tpu.vector_store %arg3[%c0_124, %c0_125, %c0_126], %161 {strides = array<i32>} : memref<1x16x16xf32, #tpu.memory_space<vmem>>, vector<1x16x16xf32>,
      %cst_127 = arith.constant 0.000000e+00 : f32
      %163 = vector.broadcast %cst_127 : f32 to vector<6x28xf32>
      %cst_128 = arith.constant 0.000000e+00 : f32
      %164 = vector.broadcast %cst_128 : f32 to vector<28x6xf32>
      %c0_129 = arith.constant 0 : index
      %c0_130 = arith.constant 0 : index
      %165 = vector.load %arg5[%c0_129, %c0_130] : memref<28x28xf32, #tpu.memory_space<vmem>>, vector<6x28xf32>
      tpu.vector_store %arg5[%c0_129, %c0_130], %163 {strides = array<i32>} : memref<28x28xf32, #tpu.memory_space<vmem>>, vector<6x28xf32>,
      %c22 = arith.constant 22 : index
      %c0_131 = arith.constant 0 : index
      %166 = vector.load %arg5[%c22, %c0_131] : memref<28x28xf32, #tpu.memory_space<vmem>>, vector<6x28xf32>
      tpu.vector_store %arg5[%c22, %c0_131], %163 {strides = array<i32>} : memref<28x28xf32, #tpu.memory_space<vmem>>, vector<6x28xf32>,
      %c0_132 = arith.constant 0 : index
      %c0_133 = arith.constant 0 : index
      %167 = vector.load %arg5[%c0_132, %c0_133] : memref<28x28xf32, #tpu.memory_space<vmem>>, vector<28x6xf32>
      tpu.vector_store %arg5[%c0_132, %c0_133], %164 {strides = array<i32>} : memref<28x28xf32, #tpu.memory_space<vmem>>, vector<28x6xf32>,
      %c0_134 = arith.constant 0 : index
      %c22_135 = arith.constant 22 : index
      %168 = vector.load %arg5[%c0_134, %c22_135] : memref<28x28xf32, #tpu.memory_space<vmem>>, vector<28x6xf32>
      tpu.vector_store %arg5[%c0_134, %c22_135], %164 {strides = array<i32>} : memref<28x28xf32, #tpu.memory_space<vmem>>, vector<28x6xf32>,
    } else {
    }
    %c0 = arith.constant 0 : index
    %c0_1 = arith.constant 0 : index
    %c0_2 = arith.constant 0 : index
    %c0_3 = arith.constant 0 : index
    %3 = vector.load %arg2[%c0, %c0_1, %c0_2, %c0_3] : memref<1x1x16x16xf32, #tpu.memory_space<vmem>>, vector<1x1x16x16xf32>
    %4 = vector.shape_cast %3 : vector<1x1x16x16xf32> to vector<16x16xf32>
    %c6 = arith.constant 6 : index
    %c6_4 = arith.constant 6 : index
    %5 = vector.load %arg5[%c6, %c6_4] : memref<28x28xf32, #tpu.memory_space<vmem>>, vector<16x16xf32>
    tpu.vector_store %arg5[%c6, %c6_4], %4 {strides = array<i32>} : memref<28x28xf32, #tpu.memory_space<vmem>>, vector<16x16xf32>,
    %c6_5 = arith.constant 6 : index
    %c0_6 = arith.constant 0 : index
    %6 = vector.load %arg5[%c6_5, %c0_6] : memref<28x28xf32, #tpu.memory_space<vmem>>, vector<16x16xf32>
    %cst = arith.constant 0.135335281 : f32
    %7 = vector.broadcast %cst : f32 to vector<16x16xf32>
    %8 = arith.mulf %7, %6 : vector<16x16xf32>
    %c6_7 = arith.constant 6 : index
    %c1 = arith.constant 1 : index
    %9 = vector.load %arg5[%c6_7, %c1] : memref<28x28xf32, #tpu.memory_space<vmem>>, vector<16x16xf32>
    %cst_8 = arith.constant 0.249352202 : f32
    %10 = vector.broadcast %cst_8 : f32 to vector<16x16xf32>
    %11 = arith.mulf %10, %9 : vector<16x16xf32>
    %12 = arith.addf %8, %11 : vector<16x16xf32>
    %c6_9 = arith.constant 6 : index
    %c2 = arith.constant 2 : index
    %13 = vector.load %arg5[%c6_9, %c2] : memref<28x28xf32, #tpu.memory_space<vmem>>, vector<16x16xf32>
    %cst_10 = arith.constant 0.411112279 : f32
    %14 = vector.broadcast %cst_10 : f32 to vector<16x16xf32>
    %15 = arith.mulf %14, %13 : vector<16x16xf32>
    %16 = arith.addf %12, %15 : vector<16x16xf32>
    %c6_11 = arith.constant 6 : index
    %c3 = arith.constant 3 : index
    %17 = vector.load %arg5[%c6_11, %c3] : memref<28x28xf32, #tpu.memory_space<vmem>>, vector<16x16xf32>
    %cst_12 = arith.constant 0.606530666 : f32
    %18 = vector.broadcast %cst_12 : f32 to vector<16x16xf32>
    %19 = arith.mulf %18, %17 : vector<16x16xf32>
    %20 = arith.addf %16, %19 : vector<16x16xf32>
    %c6_13 = arith.constant 6 : index
    %c4 = arith.constant 4 : index
    %21 = vector.load %arg5[%c6_13, %c4] : memref<28x28xf32, #tpu.memory_space<vmem>>, vector<16x16xf32>
    %cst_14 = arith.constant 0.800737381 : f32
    %22 = vector.broadcast %cst_14 : f32 to vector<16x16xf32>
    %23 = arith.mulf %22, %21 : vector<16x16xf32>
    %24 = arith.addf %20, %23 : vector<16x16xf32>
    %c6_15 = arith.constant 6 : index
    %c5 = arith.constant 5 : index
    %25 = vector.load %arg5[%c6_15, %c5] : memref<28x28xf32, #tpu.memory_space<vmem>>, vector<16x16xf32>
    %cst_16 = arith.constant 0.945959448 : f32
    %26 = vector.broadcast %cst_16 : f32 to vector<16x16xf32>
    %27 = arith.mulf %26, %25 : vector<16x16xf32>
    %28 = arith.addf %24, %27 : vector<16x16xf32>
    %c6_17 = arith.constant 6 : index
    %c6_18 = arith.constant 6 : index
    %29 = vector.load %arg5[%c6_17, %c6_18] : memref<28x28xf32, #tpu.memory_space<vmem>>, vector<16x16xf32>
    %cst_19 = arith.constant 1.000000e+00 : f32
    %30 = vector.broadcast %cst_19 : f32 to vector<16x16xf32>
    %31 = arith.mulf %30, %29 : vector<16x16xf32>
    %32 = arith.addf %28, %31 : vector<16x16xf32>
    %c6_20 = arith.constant 6 : index
    %c7 = arith.constant 7 : index
    %33 = vector.load %arg5[%c6_20, %c7] : memref<28x28xf32, #tpu.memory_space<vmem>>, vector<16x16xf32>
    %cst_21 = arith.constant 0.945959448 : f32
    %34 = vector.broadcast %cst_21 : f32 to vector<16x16xf32>
    %35 = arith.mulf %34, %33 : vector<16x16xf32>
    %36 = arith.addf %32, %35 : vector<16x16xf32>
    %c6_22 = arith.constant 6 : index
    %c8 = arith.constant 8 : index
    %37 = vector.load %arg5[%c6_22, %c8] : memref<28x28xf32, #tpu.memory_space<vmem>>, vector<16x16xf32>
    %cst_23 = arith.constant 0.800737381 : f32
    %38 = vector.broadcast %cst_23 : f32 to vector<16x16xf32>
    %39 = arith.mulf %38, %37 : vector<16x16xf32>
    %40 = arith.addf %36, %39 : vector<16x16xf32>
    %c6_24 = arith.constant 6 : index
    %c9 = arith.constant 9 : index
    %41 = vector.load %arg5[%c6_24, %c9] : memref<28x28xf32, #tpu.memory_space<vmem>>, vector<16x16xf32>
    %cst_25 = arith.constant 0.606530666 : f32
    %42 = vector.broadcast %cst_25 : f32 to vector<16x16xf32>
    %43 = arith.mulf %42, %41 : vector<16x16xf32>
    %44 = arith.addf %40, %43 : vector<16x16xf32>
    %c6_26 = arith.constant 6 : index
    %c10 = arith.constant 10 : index
    %45 = vector.load %arg5[%c6_26, %c10] : memref<28x28xf32, #tpu.memory_space<vmem>>, vector<16x16xf32>
    %cst_27 = arith.constant 0.411112279 : f32
    %46 = vector.broadcast %cst_27 : f32 to vector<16x16xf32>
    %47 = arith.mulf %46, %45 : vector<16x16xf32>
    %48 = arith.addf %44, %47 : vector<16x16xf32>
    %c6_28 = arith.constant 6 : index
    %c11 = arith.constant 11 : index
    %49 = vector.load %arg5[%c6_28, %c11] : memref<28x28xf32, #tpu.memory_space<vmem>>, vector<16x16xf32>
    %cst_29 = arith.constant 0.249352202 : f32
    %50 = vector.broadcast %cst_29 : f32 to vector<16x16xf32>
    %51 = arith.mulf %50, %49 : vector<16x16xf32>
    %52 = arith.addf %48, %51 : vector<16x16xf32>
    %c6_30 = arith.constant 6 : index
    %c12 = arith.constant 12 : index
    %53 = vector.load %arg5[%c6_30, %c12] : memref<28x28xf32, #tpu.memory_space<vmem>>, vector<16x16xf32>
    %cst_31 = arith.constant 0.135335281 : f32
    %54 = vector.broadcast %cst_31 : f32 to vector<16x16xf32>
    %55 = arith.mulf %54, %53 : vector<16x16xf32>
    %56 = arith.addf %52, %55 : vector<16x16xf32>
    %c6_32 = arith.constant 6 : index
    %c6_33 = arith.constant 6 : index
    %57 = vector.load %arg5[%c6_32, %c6_33] : memref<28x28xf32, #tpu.memory_space<vmem>>, vector<16x16xf32>
    tpu.vector_store %arg5[%c6_32, %c6_33], %56 {strides = array<i32>} : memref<28x28xf32, #tpu.memory_space<vmem>>, vector<16x16xf32>,
    %c0_34 = arith.constant 0 : index
    %c6_35 = arith.constant 6 : index
    %58 = vector.load %arg5[%c0_34, %c6_35] : memref<28x28xf32, #tpu.memory_space<vmem>>, vector<16x16xf32>
    %cst_36 = arith.constant 0.135335281 : f32
    %59 = vector.broadcast %cst_36 : f32 to vector<16x16xf32>
    %60 = arith.mulf %59, %58 : vector<16x16xf32>
    %c1_37 = arith.constant 1 : index
    %c6_38 = arith.constant 6 : index
    %61 = vector.load %arg5[%c1_37, %c6_38] : memref<28x28xf32, #tpu.memory_space<vmem>>, vector<16x16xf32>
    %cst_39 = arith.constant 0.249352202 : f32
    %62 = vector.broadcast %cst_39 : f32 to vector<16x16xf32>
    %63 = arith.mulf %62, %61 : vector<16x16xf32>
    %64 = arith.addf %60, %63 : vector<16x16xf32>
    %c2_40 = arith.constant 2 : index
    %c6_41 = arith.constant 6 : index
    %65 = vector.load %arg5[%c2_40, %c6_41] : memref<28x28xf32, #tpu.memory_space<vmem>>, vector<16x16xf32>
    %cst_42 = arith.constant 0.411112279 : f32
    %66 = vector.broadcast %cst_42 : f32 to vector<16x16xf32>
    %67 = arith.mulf %66, %65 : vector<16x16xf32>
    %68 = arith.addf %64, %67 : vector<16x16xf32>
    %c3_43 = arith.constant 3 : index
    %c6_44 = arith.constant 6 : index
    %69 = vector.load %arg5[%c3_43, %c6_44] : memref<28x28xf32, #tpu.memory_space<vmem>>, vector<16x16xf32>
    %cst_45 = arith.constant 0.606530666 : f32
    %70 = vector.broadcast %cst_45 : f32 to vector<16x16xf32>
    %71 = arith.mulf %70, %69 : vector<16x16xf32>
    %72 = arith.addf %68, %71 : vector<16x16xf32>
    %c4_46 = arith.constant 4 : index
    %c6_47 = arith.constant 6 : index
    %73 = vector.load %arg5[%c4_46, %c6_47] : memref<28x28xf32, #tpu.memory_space<vmem>>, vector<16x16xf32>
    %cst_48 = arith.constant 0.800737381 : f32
    %74 = vector.broadcast %cst_48 : f32 to vector<16x16xf32>
    %75 = arith.mulf %74, %73 : vector<16x16xf32>
    %76 = arith.addf %72, %75 : vector<16x16xf32>
    %c5_49 = arith.constant 5 : index
    %c6_50 = arith.constant 6 : index
    %77 = vector.load %arg5[%c5_49, %c6_50] : memref<28x28xf32, #tpu.memory_space<vmem>>, vector<16x16xf32>
    %cst_51 = arith.constant 0.945959448 : f32
    %78 = vector.broadcast %cst_51 : f32 to vector<16x16xf32>
    %79 = arith.mulf %78, %77 : vector<16x16xf32>
    %80 = arith.addf %76, %79 : vector<16x16xf32>
    %c6_52 = arith.constant 6 : index
    %c6_53 = arith.constant 6 : index
    %81 = vector.load %arg5[%c6_52, %c6_53] : memref<28x28xf32, #tpu.memory_space<vmem>>, vector<16x16xf32>
    %cst_54 = arith.constant 1.000000e+00 : f32
    %82 = vector.broadcast %cst_54 : f32 to vector<16x16xf32>
    %83 = arith.mulf %82, %81 : vector<16x16xf32>
    %84 = arith.addf %80, %83 : vector<16x16xf32>
    %c7_55 = arith.constant 7 : index
    %c6_56 = arith.constant 6 : index
    %85 = vector.load %arg5[%c7_55, %c6_56] : memref<28x28xf32, #tpu.memory_space<vmem>>, vector<16x16xf32>
    %cst_57 = arith.constant 0.945959448 : f32
    %86 = vector.broadcast %cst_57 : f32 to vector<16x16xf32>
    %87 = arith.mulf %86, %85 : vector<16x16xf32>
    %88 = arith.addf %84, %87 : vector<16x16xf32>
    %c8_58 = arith.constant 8 : index
    %c6_59 = arith.constant 6 : index
    %89 = vector.load %arg5[%c8_58, %c6_59] : memref<28x28xf32, #tpu.memory_space<vmem>>, vector<16x16xf32>
    %cst_60 = arith.constant 0.800737381 : f32
    %90 = vector.broadcast %cst_60 : f32 to vector<16x16xf32>
    %91 = arith.mulf %90, %89 : vector<16x16xf32>
    %92 = arith.addf %88, %91 : vector<16x16xf32>
    %c9_61 = arith.constant 9 : index
    %c6_62 = arith.constant 6 : index
    %93 = vector.load %arg5[%c9_61, %c6_62] : memref<28x28xf32, #tpu.memory_space<vmem>>, vector<16x16xf32>
    %cst_63 = arith.constant 0.606530666 : f32
    %94 = vector.broadcast %cst_63 : f32 to vector<16x16xf32>
    %95 = arith.mulf %94, %93 : vector<16x16xf32>
    %96 = arith.addf %92, %95 : vector<16x16xf32>
    %c10_64 = arith.constant 10 : index
    %c6_65 = arith.constant 6 : index
    %97 = vector.load %arg5[%c10_64, %c6_65] : memref<28x28xf32, #tpu.memory_space<vmem>>, vector<16x16xf32>
    %cst_66 = arith.constant 0.411112279 : f32
    %98 = vector.broadcast %cst_66 : f32 to vector<16x16xf32>
    %99 = arith.mulf %98, %97 : vector<16x16xf32>
    %100 = arith.addf %96, %99 : vector<16x16xf32>
    %c11_67 = arith.constant 11 : index
    %c6_68 = arith.constant 6 : index
    %101 = vector.load %arg5[%c11_67, %c6_68] : memref<28x28xf32, #tpu.memory_space<vmem>>, vector<16x16xf32>
    %cst_69 = arith.constant 0.249352202 : f32
    %102 = vector.broadcast %cst_69 : f32 to vector<16x16xf32>
    %103 = arith.mulf %102, %101 : vector<16x16xf32>
    %104 = arith.addf %100, %103 : vector<16x16xf32>
    %c12_70 = arith.constant 12 : index
    %c6_71 = arith.constant 6 : index
    %105 = vector.load %arg5[%c12_70, %c6_71] : memref<28x28xf32, #tpu.memory_space<vmem>>, vector<16x16xf32>
    %cst_72 = arith.constant 0.135335281 : f32
    %106 = vector.broadcast %cst_72 : f32 to vector<16x16xf32>
    %107 = arith.mulf %106, %105 : vector<16x16xf32>
    %108 = arith.addf %104, %107 : vector<16x16xf32>
    %c6_73 = arith.constant 6 : index
    %c6_74 = arith.constant 6 : index
    %109 = vector.load %arg5[%c6_73, %c6_74] : memref<28x28xf32, #tpu.memory_space<vmem>>, vector<16x16xf32>
    tpu.vector_store %arg5[%c6_73, %c6_74], %108 {strides = array<i32>} : memref<28x28xf32, #tpu.memory_space<vmem>>, vector<16x16xf32>,
    %c5_75 = arith.constant 5 : index
    %c5_76 = arith.constant 5 : index
    %110 = vector.load %arg5[%c5_75, %c5_76] : memref<28x28xf32, #tpu.memory_space<vmem>>, vector<16x16xf32>
    %c5_77 = arith.constant 5 : index
    %c7_78 = arith.constant 7 : index
    %111 = vector.load %arg5[%c5_77, %c7_78] : memref<28x28xf32, #tpu.memory_space<vmem>>, vector<16x16xf32>
    %112 = arith.subf %110, %111 : vector<16x16xf32>
    %c6_79 = arith.constant 6 : index
    %c5_80 = arith.constant 5 : index
    %113 = vector.load %arg5[%c6_79, %c5_80] : memref<28x28xf32, #tpu.memory_space<vmem>>, vector<16x16xf32>
    %c6_81 = arith.constant 6 : index
    %c7_82 = arith.constant 7 : index
    %114 = vector.load %arg5[%c6_81, %c7_82] : memref<28x28xf32, #tpu.memory_space<vmem>>, vector<16x16xf32>
    %115 = arith.subf %113, %114 : vector<16x16xf32>
    %cst_83 = arith.constant 2.000000e+00 : f32
    %116 = vector.broadcast %cst_83 : f32 to vector<16x16xf32>
    %117 = arith.mulf %116, %115 : vector<16x16xf32>
    %118 = arith.addf %112, %117 : vector<16x16xf32>
    %c7_84 = arith.constant 7 : index
    %c5_85 = arith.constant 5 : index
    %119 = vector.load %arg5[%c7_84, %c5_85] : memref<28x28xf32, #tpu.memory_space<vmem>>, vector<16x16xf32>
    %c7_86 = arith.constant 7 : index
    %c7_87 = arith.constant 7 : index
    %120 = vector.load %arg5[%c7_86, %c7_87] : memref<28x28xf32, #tpu.memory_space<vmem>>, vector<16x16xf32>
    %121 = arith.subf %119, %120 : vector<16x16xf32>
    %122 = arith.addf %118, %121 : vector<16x16xf32>
    %c5_88 = arith.constant 5 : index
    %c5_89 = arith.constant 5 : index
    %123 = vector.load %arg5[%c5_88, %c5_89] : memref<28x28xf32, #tpu.memory_space<vmem>>, vector<16x16xf32>
    %c5_90 = arith.constant 5 : index
    %c6_91 = arith.constant 6 : index
    %124 = vector.load %arg5[%c5_90, %c6_91] : memref<28x28xf32, #tpu.memory_space<vmem>>, vector<16x16xf32>
    %cst_92 = arith.constant 2.000000e+00 : f32
    %125 = vector.broadcast %cst_92 : f32 to vector<16x16xf32>
    %126 = arith.mulf %125, %124 : vector<16x16xf32>
    %127 = arith.addf %123, %126 : vector<16x16xf32>
    %c5_93 = arith.constant 5 : index
    %c7_94 = arith.constant 7 : index
    %128 = vector.load %arg5[%c5_93, %c7_94] : memref<28x28xf32, #tpu.memory_space<vmem>>, vector<16x16xf32>
    %129 = arith.addf %127, %128 : vector<16x16xf32>
    %c7_95 = arith.constant 7 : index
    %c5_96 = arith.constant 5 : index
    %130 = vector.load %arg5[%c7_95, %c5_96] : memref<28x28xf32, #tpu.memory_space<vmem>>, vector<16x16xf32>
    %c7_97 = arith.constant 7 : index
    %c6_98 = arith.constant 6 : index
    %131 = vector.load %arg5[%c7_97, %c6_98] : memref<28x28xf32, #tpu.memory_space<vmem>>, vector<16x16xf32>
    %cst_99 = arith.constant 2.000000e+00 : f32
    %132 = vector.broadcast %cst_99 : f32 to vector<16x16xf32>
    %133 = arith.mulf %132, %131 : vector<16x16xf32>
    %134 = arith.addf %130, %133 : vector<16x16xf32>
    %c7_100 = arith.constant 7 : index
    %c7_101 = arith.constant 7 : index
    %135 = vector.load %arg5[%c7_100, %c7_101] : memref<28x28xf32, #tpu.memory_space<vmem>>, vector<16x16xf32>
    %136 = arith.addf %134, %135 : vector<16x16xf32>
    %137 = arith.subf %129, %136 : vector<16x16xf32>
    %c0_102 = arith.constant 0 : index
    %c0_103 = arith.constant 0 : index
    %138 = vector.load %arg6[%c0_102, %c0_103] : memref<16x16xf32, #tpu.memory_space<vmem>>, vector<16x16xf32>
    %139 = arith.addf %138, %122 : vector<16x16xf32>
    %c0_104 = arith.constant 0 : index
    %c0_105 = arith.constant 0 : index
    %140 = vector.load %arg6[%c0_104, %c0_105] : memref<16x16xf32, #tpu.memory_space<vmem>>, vector<16x16xf32>
    tpu.vector_store %arg6[%c0_104, %c0_105], %139 {strides = array<i32>} : memref<16x16xf32, #tpu.memory_space<vmem>>, vector<16x16xf32>,
    %c0_106 = arith.constant 0 : index
    %c0_107 = arith.constant 0 : index
    %141 = vector.load %arg7[%c0_106, %c0_107] : memref<16x16xf32, #tpu.memory_space<vmem>>, vector<16x16xf32>
    %142 = arith.addf %141, %137 : vector<16x16xf32>
    %c0_108 = arith.constant 0 : index
    %c0_109 = arith.constant 0 : index
    %143 = vector.load %arg7[%c0_108, %c0_109] : memref<16x16xf32, #tpu.memory_space<vmem>>, vector<16x16xf32>
    tpu.vector_store %arg7[%c0_108, %c0_109], %142 {strides = array<i32>} : memref<16x16xf32, #tpu.memory_space<vmem>>, vector<16x16xf32>,
    %c0_110 = arith.constant 0 : index
    %c0_111 = arith.constant 0 : index
    %c0_112 = arith.constant 0 : index
    %144 = vector.load %arg3[%c0_110, %c0_111, %c0_112] : memref<1x16x16xf32, #tpu.memory_space<vmem>>, vector<1x16x16xf32>
    %145 = vector.shape_cast %144 : vector<1x16x16xf32> to vector<16x16xf32>
    %146 = arith.mulf %122, %122 : vector<16x16xf32>
    %147 = arith.mulf %137, %137 : vector<16x16xf32>
    %148 = arith.addf %146, %147 : vector<16x16xf32>
    %149 = math.sqrt %148 : vector<16x16xf32>
    %150 = arith.addf %145, %149 : vector<16x16xf32>
    %c0_113 = arith.constant 0 : index
    %c0_114 = arith.constant 0 : index
    %c0_115 = arith.constant 0 : index
    %151 = vector.load %arg3[%c0_113, %c0_114, %c0_115] : memref<1x16x16xf32, #tpu.memory_space<vmem>>, vector<1x16x16xf32>
    %152 = vector.shape_cast %151 : vector<1x16x16xf32> to vector<16x16xf32>
    %153 = vector.shape_cast %150 : vector<16x16xf32> to vector<1x16x16xf32>
    tpu.vector_store %arg3[%c0_113, %c0_114, %c0_115], %153 {strides = array<i32>} : memref<1x16x16xf32, #tpu.memory_space<vmem>>, vector<1x16x16xf32>,
    %c3_i32 = arith.constant 3 : i32
    %154 = arith.cmpi eq, %arg1, %c3_i32 : i32
    %155 = arith.extui %154 : i1 to i32
    %c0_i32_116 = arith.constant 0 : i32
    %156 = arith.cmpi ne, %155, %c0_i32_116 : i32
    scf.if %156 {
      %c0_117 = arith.constant 0 : index
      %c0_118 = arith.constant 0 : index
      %157 = vector.load %arg6[%c0_117, %c0_118] : memref<16x16xf32, #tpu.memory_space<vmem>>, vector<16x16xf32>
      %c0_119 = arith.constant 0 : index
      %c0_120 = arith.constant 0 : index
      %158 = vector.load %arg7[%c0_119, %c0_120] : memref<16x16xf32, #tpu.memory_space<vmem>>, vector<16x16xf32>
      %159 = math.absf %157 : vector<16x16xf32>
      %160 = math.absf %158 : vector<16x16xf32>
      %cst_121 = arith.constant 0.414213568 : f32
      %161 = vector.broadcast %cst_121 : f32 to vector<16x16xf32>
      %162 = arith.mulf %161, %159 : vector<16x16xf32>
      %163 = arith.cmpf olt, %160, %162 : vector<16x16xf32>
      %cst_122 = arith.constant 2.41421366 : f32
      %164 = vector.broadcast %cst_122 : f32 to vector<16x16xf32>
      %165 = arith.mulf %164, %159 : vector<16x16xf32>
      %166 = arith.cmpf ogt, %160, %165 : vector<16x16xf32>
      %cst_123 = arith.constant 0.000000e+00 : f32
      %167 = vector.broadcast %cst_123 : f32 to vector<16x16xf32>
      %168 = arith.cmpf ogt, %157, %167 : vector<16x16xf32>
      %cst_124 = arith.constant 0.000000e+00 : f32
      %169 = vector.broadcast %cst_124 : f32 to vector<16x16xf32>
      %170 = arith.cmpf ogt, %158, %169 : vector<16x16xf32>
      %c5_i32 = arith.constant 5 : i32
      %c3_i32_125 = arith.constant 3 : i32
      %171 = vector.broadcast %c5_i32 : i32 to vector<16x16xi32>
      %172 = vector.broadcast %c3_i32_125 : i32 to vector<16x16xi32>
      %173 = arith.select %170, %171, %172 : vector<16x16xi1>, vector<16x16xi32>
      %cst_126 = arith.constant 0.000000e+00 : f32
      %174 = vector.broadcast %cst_126 : f32 to vector<16x16xf32>
      %175 = arith.cmpf ogt, %158, %174 : vector<16x16xf32>
      %c7_i32 = arith.constant 7 : i32
      %c1_i32 = arith.constant 1 : i32
      %176 = vector.broadcast %c7_i32 : i32 to vector<16x16xi32>
      %177 = vector.broadcast %c1_i32 : i32 to vector<16x16xi32>
      %178 = arith.select %175, %176, %177 : vector<16x16xi1>, vector<16x16xi32>
      %179 = arith.select %168, %173, %178 : vector<16x16xi1>, vector<16x16xi32>
      %cst_127 = arith.constant 0.000000e+00 : f32
      %180 = vector.broadcast %cst_127 : f32 to vector<16x16xf32>
      %181 = arith.cmpf ogt, %157, %180 : vector<16x16xf32>
      %c4_i32 = arith.constant 4 : i32
      %c0_i32_128 = arith.constant 0 : i32
      %182 = vector.broadcast %c4_i32 : i32 to vector<16x16xi32>
      %183 = vector.broadcast %c0_i32_128 : i32 to vector<16x16xi32>
      %184 = arith.select %181, %182, %183 : vector<16x16xi1>, vector<16x16xi32>
      %cst_129 = arith.constant 0.000000e+00 : f32
      %185 = vector.broadcast %cst_129 : f32 to vector<16x16xf32>
      %186 = arith.cmpf ogt, %158, %185 : vector<16x16xf32>
      %c6_i32 = arith.constant 6 : i32
      %c2_i32 = arith.constant 2 : i32
      %187 = vector.broadcast %c6_i32 : i32 to vector<16x16xi32>
      %188 = vector.broadcast %c2_i32 : i32 to vector<16x16xi32>
      %189 = arith.select %186, %187, %188 : vector<16x16xi1>, vector<16x16xi32>
      %190 = arith.select %166, %189, %179 : vector<16x16xi1>, vector<16x16xi32>
      %191 = arith.select %163, %184, %190 : vector<16x16xi1>, vector<16x16xi32>
      %cst_130 = arith.constant 0.000000e+00 : f32
      %192 = vector.broadcast %cst_130 : f32 to vector<16x16xf32>
      %193 = arith.cmpf oeq, %157, %192 : vector<16x16xf32>
      %cst_131 = arith.constant 0.000000e+00 : f32
      %194 = vector.broadcast %cst_131 : f32 to vector<16x16xf32>
      %195 = arith.cmpf oeq, %158, %194 : vector<16x16xf32>
      %196 = arith.andi %193, %195 : vector<16x16xi1>
      %c4_i32_132 = arith.constant 4 : i32
      %197 = vector.broadcast %c4_i32_132 : i32 to vector<16x16xi32>
      %198 = arith.select %196, %197, %191 : vector<16x16xi1>, vector<16x16xi32>
      %199 = arith.trunci %198 : vector<16x16xi32> to vector<16x16xi8>
      %c0_133 = arith.constant 0 : index
      %c0_134 = arith.constant 0 : index
      %c0_135 = arith.constant 0 : index
      %200 = vector.load %arg4[%c0_133, %c0_134, %c0_135] : memref<1x16x16xi8, #tpu.memory_space<vmem>>, vector<1x16x16xi8>
      %201 = vector.shape_cast %200 : vector<1x16x16xi8> to vector<16x16xi8>
      %202 = vector.shape_cast %199 : vector<16x16xi8> to vector<1x16x16xi8>
      tpu.vector_store %arg4[%c0_133, %c0_134, %c0_135], %202 {strides = array<i32>} : memref<1x16x16xi8, #tpu.memory_space<vmem>>, vector<1x16x16xi8>,
    } else {
    }
    return
  }
  func.func @transform_0(%arg0: i32, %arg1: i32) -> (i32, i32, i32, i32) {
    %c0_i32 = arith.constant 0 : i32
    %c0_i32_0 = arith.constant 0 : i32
    %c0_i32_1 = arith.constant 0 : i32
    return %arg0, %arg1, %c0_i32, %c0_i32_0 : i32, i32, i32, i32
  }
  func.func @transform_1(%arg0: i32, %arg1: i32) -> (i32, i32, i32) {
    %c0_i32 = arith.constant 0 : i32
    %c0_i32_0 = arith.constant 0 : i32
    %c0_i32_1 = arith.constant 0 : i32
    return %arg0, %c0_i32, %c0_i32_0 : i32, i32, i32
  }
  func.func @transform_2(%arg0: i32, %arg1: i32) -> (i32, i32, i32) {
    %c0_i32 = arith.constant 0 : i32
    %c0_i32_0 = arith.constant 0 : i32
    %c0_i32_1 = arith.constant 0 : i32
    return %arg0, %c0_i32, %c0_i32_0 : i32, i32, i32
  }
}

module attributes {stable_mosaic.version = 11 : i64} {
  func.func @_nms_hyst_kernel(%arg0: memref<2xf32, #tpu.memory_space<smem>>, %arg1: memref<2x16x16xf32, #tpu.memory_space<vmem>>, %arg2: memref<2x16x16xi8, #tpu.memory_space<vmem>>, %arg3: memref<2x1x16x16xf32, #tpu.memory_space<vmem>>, %arg4: memref<2x18x18xf32, #tpu.memory_space<vmem>>, %arg5: memref<18x18xf32, #tpu.memory_space<vmem>>) attributes {dimension_semantics = [], scalar_prefetch = 0 : i64, scratch_operands = 2 : i64, tpu.core_type = #tpu.core_type<tc>} {
    %c0 = arith.constant 0 : index
    %0 = memref.load %arg0[%c0] : memref<2xf32, #tpu.memory_space<smem>>
    %c1 = arith.constant 1 : index
    %1 = memref.load %arg0[%c1] : memref<2xf32, #tpu.memory_space<smem>>
    %cst = arith.constant 0.000000e+00 : f32
    %2 = vector.broadcast %cst : f32 to vector<1x18xf32>
    %cst_0 = arith.constant 0.000000e+00 : f32
    %3 = vector.broadcast %cst_0 : f32 to vector<18x1xf32>
    %c0_1 = arith.constant 0 : index
    %c0_2 = arith.constant 0 : index
    %c0_3 = arith.constant 0 : index
    %4 = vector.load %arg4[%c0_1, %c0_2, %c0_3] : memref<2x18x18xf32, #tpu.memory_space<vmem>>, vector<1x1x18xf32>
    %5 = vector.shape_cast %4 : vector<1x1x18xf32> to vector<1x18xf32>
    %6 = vector.shape_cast %2 : vector<1x18xf32> to vector<1x1x18xf32>
    tpu.vector_store %arg4[%c0_1, %c0_2, %c0_3], %6 {strides = array<i32>} : memref<2x18x18xf32, #tpu.memory_space<vmem>>, vector<1x1x18xf32>,
    %c0_4 = arith.constant 0 : index
    %c17 = arith.constant 17 : index
    %c0_5 = arith.constant 0 : index
    %7 = vector.load %arg4[%c0_4, %c17, %c0_5] : memref<2x18x18xf32, #tpu.memory_space<vmem>>, vector<1x1x18xf32>
    %8 = vector.shape_cast %7 : vector<1x1x18xf32> to vector<1x18xf32>
    %9 = vector.shape_cast %2 : vector<1x18xf32> to vector<1x1x18xf32>
    tpu.vector_store %arg4[%c0_4, %c17, %c0_5], %9 {strides = array<i32>} : memref<2x18x18xf32, #tpu.memory_space<vmem>>, vector<1x1x18xf32>,
    %c0_6 = arith.constant 0 : index
    %c0_7 = arith.constant 0 : index
    %c0_8 = arith.constant 0 : index
    %10 = vector.load %arg4[%c0_6, %c0_7, %c0_8] : memref<2x18x18xf32, #tpu.memory_space<vmem>>, vector<1x18x1xf32>
    %11 = vector.shape_cast %10 : vector<1x18x1xf32> to vector<18x1xf32>
    %12 = vector.shape_cast %3 : vector<18x1xf32> to vector<1x18x1xf32>
    tpu.vector_store %arg4[%c0_6, %c0_7, %c0_8], %12 {strides = array<i32>} : memref<2x18x18xf32, #tpu.memory_space<vmem>>, vector<1x18x1xf32>,
    %c0_9 = arith.constant 0 : index
    %c0_10 = arith.constant 0 : index
    %c17_11 = arith.constant 17 : index
    %13 = vector.load %arg4[%c0_9, %c0_10, %c17_11] : memref<2x18x18xf32, #tpu.memory_space<vmem>>, vector<1x18x1xf32>
    %14 = vector.shape_cast %13 : vector<1x18x1xf32> to vector<18x1xf32>
    %15 = vector.shape_cast %3 : vector<18x1xf32> to vector<1x18x1xf32>
    tpu.vector_store %arg4[%c0_9, %c0_10, %c17_11], %15 {strides = array<i32>} : memref<2x18x18xf32, #tpu.memory_space<vmem>>, vector<1x18x1xf32>,
    %c0_12 = arith.constant 0 : index
    %c0_13 = arith.constant 0 : index
    %c0_14 = arith.constant 0 : index
    %16 = vector.load %arg1[%c0_12, %c0_13, %c0_14] : memref<2x16x16xf32, #tpu.memory_space<vmem>>, vector<1x16x16xf32>
    %17 = vector.shape_cast %16 : vector<1x16x16xf32> to vector<16x16xf32>
    %c0_15 = arith.constant 0 : index
    %c1_16 = arith.constant 1 : index
    %c1_17 = arith.constant 1 : index
    %18 = vector.load %arg4[%c0_15, %c1_16, %c1_17] : memref<2x18x18xf32, #tpu.memory_space<vmem>>, vector<1x16x16xf32>
    %19 = vector.shape_cast %18 : vector<1x16x16xf32> to vector<16x16xf32>
    %20 = vector.shape_cast %17 : vector<16x16xf32> to vector<1x16x16xf32>
    tpu.vector_store %arg4[%c0_15, %c1_16, %c1_17], %20 {strides = array<i32>} : memref<2x18x18xf32, #tpu.memory_space<vmem>>, vector<1x16x16xf32>,
    %c1_18 = arith.constant 1 : index
    %c0_19 = arith.constant 0 : index
    %c0_20 = arith.constant 0 : index
    %21 = vector.load %arg4[%c1_18, %c0_19, %c0_20] : memref<2x18x18xf32, #tpu.memory_space<vmem>>, vector<1x1x18xf32>
    %22 = vector.shape_cast %21 : vector<1x1x18xf32> to vector<1x18xf32>
    %23 = vector.shape_cast %2 : vector<1x18xf32> to vector<1x1x18xf32>
    tpu.vector_store %arg4[%c1_18, %c0_19, %c0_20], %23 {strides = array<i32>} : memref<2x18x18xf32, #tpu.memory_space<vmem>>, vector<1x1x18xf32>,
    %c1_21 = arith.constant 1 : index
    %c17_22 = arith.constant 17 : index
    %c0_23 = arith.constant 0 : index
    %24 = vector.load %arg4[%c1_21, %c17_22, %c0_23] : memref<2x18x18xf32, #tpu.memory_space<vmem>>, vector<1x1x18xf32>
    %25 = vector.shape_cast %24 : vector<1x1x18xf32> to vector<1x18xf32>
    %26 = vector.shape_cast %2 : vector<1x18xf32> to vector<1x1x18xf32>
    tpu.vector_store %arg4[%c1_21, %c17_22, %c0_23], %26 {strides = array<i32>} : memref<2x18x18xf32, #tpu.memory_space<vmem>>, vector<1x1x18xf32>,
    %c1_24 = arith.constant 1 : index
    %c0_25 = arith.constant 0 : index
    %c0_26 = arith.constant 0 : index
    %27 = vector.load %arg4[%c1_24, %c0_25, %c0_26] : memref<2x18x18xf32, #tpu.memory_space<vmem>>, vector<1x18x1xf32>
    %28 = vector.shape_cast %27 : vector<1x18x1xf32> to vector<18x1xf32>
    %29 = vector.shape_cast %3 : vector<18x1xf32> to vector<1x18x1xf32>
    tpu.vector_store %arg4[%c1_24, %c0_25, %c0_26], %29 {strides = array<i32>} : memref<2x18x18xf32, #tpu.memory_space<vmem>>, vector<1x18x1xf32>,
    %c1_27 = arith.constant 1 : index
    %c0_28 = arith.constant 0 : index
    %c17_29 = arith.constant 17 : index
    %30 = vector.load %arg4[%c1_27, %c0_28, %c17_29] : memref<2x18x18xf32, #tpu.memory_space<vmem>>, vector<1x18x1xf32>
    %31 = vector.shape_cast %30 : vector<1x18x1xf32> to vector<18x1xf32>
    %32 = vector.shape_cast %3 : vector<18x1xf32> to vector<1x18x1xf32>
    tpu.vector_store %arg4[%c1_27, %c0_28, %c17_29], %32 {strides = array<i32>} : memref<2x18x18xf32, #tpu.memory_space<vmem>>, vector<1x18x1xf32>,
    %c1_30 = arith.constant 1 : index
    %c0_31 = arith.constant 0 : index
    %c0_32 = arith.constant 0 : index
    %33 = vector.load %arg1[%c1_30, %c0_31, %c0_32] : memref<2x16x16xf32, #tpu.memory_space<vmem>>, vector<1x16x16xf32>
    %34 = vector.shape_cast %33 : vector<1x16x16xf32> to vector<16x16xf32>
    %c1_33 = arith.constant 1 : index
    %c1_34 = arith.constant 1 : index
    %c1_35 = arith.constant 1 : index
    %35 = vector.load %arg4[%c1_33, %c1_34, %c1_35] : memref<2x18x18xf32, #tpu.memory_space<vmem>>, vector<1x16x16xf32>
    %36 = vector.shape_cast %35 : vector<1x16x16xf32> to vector<16x16xf32>
    %37 = vector.shape_cast %34 : vector<16x16xf32> to vector<1x16x16xf32>
    tpu.vector_store %arg4[%c1_33, %c1_34, %c1_35], %37 {strides = array<i32>} : memref<2x18x18xf32, #tpu.memory_space<vmem>>, vector<1x16x16xf32>,
    %c0_36 = arith.constant 0 : index
    %c0_37 = arith.constant 0 : index
    %38 = vector.load %arg5[%c0_36, %c0_37] : memref<18x18xf32, #tpu.memory_space<vmem>>, vector<1x18xf32>
    tpu.vector_store %arg5[%c0_36, %c0_37], %2 {strides = array<i32>} : memref<18x18xf32, #tpu.memory_space<vmem>>, vector<1x18xf32>,
    %c17_38 = arith.constant 17 : index
    %c0_39 = arith.constant 0 : index
    %39 = vector.load %arg5[%c17_38, %c0_39] : memref<18x18xf32, #tpu.memory_space<vmem>>, vector<1x18xf32>
    tpu.vector_store %arg5[%c17_38, %c0_39], %2 {strides = array<i32>} : memref<18x18xf32, #tpu.memory_space<vmem>>, vector<1x18xf32>,
    %c0_40 = arith.constant 0 : index
    %c0_41 = arith.constant 0 : index
    %40 = vector.load %arg5[%c0_40, %c0_41] : memref<18x18xf32, #tpu.memory_space<vmem>>, vector<18x1xf32>
    tpu.vector_store %arg5[%c0_40, %c0_41], %3 {strides = array<i32>} : memref<18x18xf32, #tpu.memory_space<vmem>>, vector<18x1xf32>,
    %c0_42 = arith.constant 0 : index
    %c17_43 = arith.constant 17 : index
    %41 = vector.load %arg5[%c0_42, %c17_43] : memref<18x18xf32, #tpu.memory_space<vmem>>, vector<18x1xf32>
    tpu.vector_store %arg5[%c0_42, %c17_43], %3 {strides = array<i32>} : memref<18x18xf32, #tpu.memory_space<vmem>>, vector<18x1xf32>,
    %c0_44 = arith.constant 0 : index
    %c0_45 = arith.constant 0 : index
    %c0_46 = arith.constant 0 : index
    %42 = vector.load %arg2[%c0_44, %c0_45, %c0_46] : memref<2x16x16xi8, #tpu.memory_space<vmem>>, vector<2x16x16xi8>
    %43 = arith.extsi %42 : vector<2x16x16xi8> to vector<2x16x16xi32>
    %44 = tpu.iota {dimensions = array<i32: 0>} : vector<16x16xi32>
    %45 = tpu.iota {dimensions = array<i32: 1>} : vector<16x16xi32>
    %c0_i32 = arith.constant 0 : i32
    %46 = vector.broadcast %c0_i32 : i32 to vector<16x16xi32>
    %47 = arith.cmpi sgt, %44, %46 : vector<16x16xi32>
    %c15_i32 = arith.constant 15 : i32
    %48 = vector.broadcast %c15_i32 : i32 to vector<16x16xi32>
    %49 = arith.cmpi slt, %44, %48 : vector<16x16xi32>
    %50 = arith.andi %47, %49 : vector<16x16xi1>
    %c0_i32_47 = arith.constant 0 : i32
    %51 = vector.broadcast %c0_i32_47 : i32 to vector<16x16xi32>
    %52 = arith.cmpi sgt, %45, %51 : vector<16x16xi32>
    %53 = arith.andi %50, %52 : vector<16x16xi1>
    %c15_i32_48 = arith.constant 15 : i32
    %54 = vector.broadcast %c15_i32_48 : i32 to vector<16x16xi32>
    %55 = arith.cmpi slt, %45, %54 : vector<16x16xi32>
    %56 = arith.andi %53, %55 : vector<16x16xi1>
    %57 = vector.extract_strided_slice %43 {offsets = [0, 0, 0], sizes = [1, 16, 16], strides = [1, 1, 1]} : vector<2x16x16xi32> to vector<1x16x16xi32>
    %58 = vector.shape_cast %57 : vector<1x16x16xi32> to vector<16x16xi32>
    %cst_49 = arith.constant 0.000000e+00 : f32
    %59 = vector.broadcast %cst_49 : f32 to vector<16x16xf32>
    %cst_50 = arith.constant 0.000000e+00 : f32
    %60 = vector.broadcast %cst_50 : f32 to vector<16x16xf32>
    %c0_51 = arith.constant 0 : index
    %c0_52 = arith.constant 0 : index
    %c0_53 = arith.constant 0 : index
    %61 = vector.load %arg1[%c0_51, %c0_52, %c0_53] : memref<2x16x16xf32, #tpu.memory_space<vmem>>, vector<1x16x16xf32>
    %62 = vector.shape_cast %61 : vector<1x16x16xf32> to vector<16x16xf32>
    %c0_54 = arith.constant 0 : index
    %c1_55 = arith.constant 1 : index
    %c2 = arith.constant 2 : index
    %63 = vector.load %arg4[%c0_54, %c1_55, %c2] : memref<2x18x18xf32, #tpu.memory_space<vmem>>, vector<1x16x16xf32>
    %64 = vector.shape_cast %63 : vector<1x16x16xf32> to vector<16x16xf32>
    %65 = arith.subf %62, %64 : vector<16x16xf32>
    %c0_i32_56 = arith.constant 0 : i32
    %66 = vector.broadcast %c0_i32_56 : i32 to vector<16x16xi32>
    %67 = arith.cmpi eq, %58, %66 : vector<16x16xi32>
    %cst_57 = arith.constant 0.000000e+00 : f32
    %68 = vector.broadcast %cst_57 : f32 to vector<16x16xf32>
    %69 = arith.select %67, %65, %68 : vector<16x16xi1>, vector<16x16xf32>
    %70 = arith.addf %59, %69 : vector<16x16xf32>
    %c4_i32 = arith.constant 4 : i32
    %71 = vector.broadcast %c4_i32 : i32 to vector<16x16xi32>
    %72 = arith.cmpi eq, %58, %71 : vector<16x16xi32>
    %cst_58 = arith.constant 0.000000e+00 : f32
    %73 = vector.broadcast %cst_58 : f32 to vector<16x16xf32>
    %74 = arith.select %72, %65, %73 : vector<16x16xi1>, vector<16x16xf32>
    %75 = arith.addf %60, %74 : vector<16x16xf32>
    %c0_59 = arith.constant 0 : index
    %c0_60 = arith.constant 0 : index
    %c0_61 = arith.constant 0 : index
    %76 = vector.load %arg1[%c0_59, %c0_60, %c0_61] : memref<2x16x16xf32, #tpu.memory_space<vmem>>, vector<1x16x16xf32>
    %77 = vector.shape_cast %76 : vector<1x16x16xf32> to vector<16x16xf32>
    %c0_62 = arith.constant 0 : index
    %c2_63 = arith.constant 2 : index
    %c1_64 = arith.constant 1 : index
    %78 = vector.load %arg4[%c0_62, %c2_63, %c1_64] : memref<2x18x18xf32, #tpu.memory_space<vmem>>, vector<1x16x16xf32>
    %79 = vector.shape_cast %78 : vector<1x16x16xf32> to vector<16x16xf32>
    %80 = arith.subf %77, %79 : vector<16x16xf32>
    %c1_i32 = arith.constant 1 : i32
    %81 = vector.broadcast %c1_i32 : i32 to vector<16x16xi32>
    %82 = arith.cmpi eq, %58, %81 : vector<16x16xi32>
    %cst_65 = arith.constant 0.000000e+00 : f32
    %83 = vector.broadcast %cst_65 : f32 to vector<16x16xf32>
    %84 = arith.select %82, %80, %83 : vector<16x16xi1>, vector<16x16xf32>
    %85 = arith.addf %70, %84 : vector<16x16xf32>
    %c5_i32 = arith.constant 5 : i32
    %86 = vector.broadcast %c5_i32 : i32 to vector<16x16xi32>
    %87 = arith.cmpi eq, %58, %86 : vector<16x16xi32>
    %cst_66 = arith.constant 0.000000e+00 : f32
    %88 = vector.broadcast %cst_66 : f32 to vector<16x16xf32>
    %89 = arith.select %87, %80, %88 : vector<16x16xi1>, vector<16x16xf32>
    %90 = arith.addf %75, %89 : vector<16x16xf32>
    %c0_67 = arith.constant 0 : index
    %c0_68 = arith.constant 0 : index
    %c0_69 = arith.constant 0 : index
    %91 = vector.load %arg1[%c0_67, %c0_68, %c0_69] : memref<2x16x16xf32, #tpu.memory_space<vmem>>, vector<1x16x16xf32>
    %92 = vector.shape_cast %91 : vector<1x16x16xf32> to vector<16x16xf32>
    %c0_70 = arith.constant 0 : index
    %c1_71 = arith.constant 1 : index
    %c0_72 = arith.constant 0 : index
    %93 = vector.load %arg4[%c0_70, %c1_71, %c0_72] : memref<2x18x18xf32, #tpu.memory_space<vmem>>, vector<1x16x16xf32>
    %94 = vector.shape_cast %93 : vector<1x16x16xf32> to vector<16x16xf32>
    %95 = arith.subf %92, %94 : vector<16x16xf32>
    %c2_i32 = arith.constant 2 : i32
    %96 = vector.broadcast %c2_i32 : i32 to vector<16x16xi32>
    %97 = arith.cmpi eq, %58, %96 : vector<16x16xi32>
    %cst_73 = arith.constant 0.000000e+00 : f32
    %98 = vector.broadcast %cst_73 : f32 to vector<16x16xf32>
    %99 = arith.select %97, %95, %98 : vector<16x16xi1>, vector<16x16xf32>
    %100 = arith.addf %85, %99 : vector<16x16xf32>
    %c6_i32 = arith.constant 6 : i32
    %101 = vector.broadcast %c6_i32 : i32 to vector<16x16xi32>
    %102 = arith.cmpi eq, %58, %101 : vector<16x16xi32>
    %cst_74 = arith.constant 0.000000e+00 : f32
    %103 = vector.broadcast %cst_74 : f32 to vector<16x16xf32>
    %104 = arith.select %102, %95, %103 : vector<16x16xi1>, vector<16x16xf32>
    %105 = arith.addf %90, %104 : vector<16x16xf32>
    %c0_75 = arith.constant 0 : index
    %c0_76 = arith.constant 0 : index
    %c0_77 = arith.constant 0 : index
    %106 = vector.load %arg1[%c0_75, %c0_76, %c0_77] : memref<2x16x16xf32, #tpu.memory_space<vmem>>, vector<1x16x16xf32>
    %107 = vector.shape_cast %106 : vector<1x16x16xf32> to vector<16x16xf32>
    %c0_78 = arith.constant 0 : index
    %c0_79 = arith.constant 0 : index
    %c1_80 = arith.constant 1 : index
    %108 = vector.load %arg4[%c0_78, %c0_79, %c1_80] : memref<2x18x18xf32, #tpu.memory_space<vmem>>, vector<1x16x16xf32>
    %109 = vector.shape_cast %108 : vector<1x16x16xf32> to vector<16x16xf32>
    %110 = arith.subf %107, %109 : vector<16x16xf32>
    %c3_i32 = arith.constant 3 : i32
    %111 = vector.broadcast %c3_i32 : i32 to vector<16x16xi32>
    %112 = arith.cmpi eq, %58, %111 : vector<16x16xi32>
    %cst_81 = arith.constant 0.000000e+00 : f32
    %113 = vector.broadcast %cst_81 : f32 to vector<16x16xf32>
    %114 = arith.select %112, %110, %113 : vector<16x16xi1>, vector<16x16xf32>
    %115 = arith.addf %100, %114 : vector<16x16xf32>
    %c7_i32 = arith.constant 7 : i32
    %116 = vector.broadcast %c7_i32 : i32 to vector<16x16xi32>
    %117 = arith.cmpi eq, %58, %116 : vector<16x16xi32>
    %cst_82 = arith.constant 0.000000e+00 : f32
    %118 = vector.broadcast %cst_82 : f32 to vector<16x16xf32>
    %119 = arith.select %117, %110, %118 : vector<16x16xi1>, vector<16x16xf32>
    %120 = arith.addf %105, %119 : vector<16x16xf32>
    %c1_83 = arith.constant 1 : index
    %c0_84 = arith.constant 0 : index
    %c0_85 = arith.constant 0 : index
    %121 = vector.load %arg1[%c1_83, %c0_84, %c0_85] : memref<2x16x16xf32, #tpu.memory_space<vmem>>, vector<1x16x16xf32>
    %122 = vector.shape_cast %121 : vector<1x16x16xf32> to vector<16x16xf32>
    %c1_86 = arith.constant 1 : index
    %c1_87 = arith.constant 1 : index
    %c2_88 = arith.constant 2 : index
    %123 = vector.load %arg4[%c1_86, %c1_87, %c2_88] : memref<2x18x18xf32, #tpu.memory_space<vmem>>, vector<1x16x16xf32>
    %124 = vector.shape_cast %123 : vector<1x16x16xf32> to vector<16x16xf32>
    %125 = arith.subf %122, %124 : vector<16x16xf32>
    %c4_i32_89 = arith.constant 4 : i32
    %126 = vector.broadcast %c4_i32_89 : i32 to vector<16x16xi32>
    %127 = arith.cmpi eq, %58, %126 : vector<16x16xi32>
    %cst_90 = arith.constant 0.000000e+00 : f32
    %128 = vector.broadcast %cst_90 : f32 to vector<16x16xf32>
    %129 = arith.select %127, %125, %128 : vector<16x16xi1>, vector<16x16xf32>
    %130 = arith.addf %115, %129 : vector<16x16xf32>
    %c0_i32_91 = arith.constant 0 : i32
    %131 = vector.broadcast %c0_i32_91 : i32 to vector<16x16xi32>
    %132 = arith.cmpi eq, %58, %131 : vector<16x16xi32>
    %cst_92 = arith.constant 0.000000e+00 : f32
    %133 = vector.broadcast %cst_92 : f32 to vector<16x16xf32>
    %134 = arith.select %132, %125, %133 : vector<16x16xi1>, vector<16x16xf32>
    %135 = arith.addf %120, %134 : vector<16x16xf32>
    %c1_93 = arith.constant 1 : index
    %c0_94 = arith.constant 0 : index
    %c0_95 = arith.constant 0 : index
    %136 = vector.load %arg1[%c1_93, %c0_94, %c0_95] : memref<2x16x16xf32, #tpu.memory_space<vmem>>, vector<1x16x16xf32>
    %137 = vector.shape_cast %136 : vector<1x16x16xf32> to vector<16x16xf32>
    %c1_96 = arith.constant 1 : index
    %c2_97 = arith.constant 2 : index
    %c1_98 = arith.constant 1 : index
    %138 = vector.load %arg4[%c1_96, %c2_97, %c1_98] : memref<2x18x18xf32, #tpu.memory_space<vmem>>, vector<1x16x16xf32>
    %139 = vector.shape_cast %138 : vector<1x16x16xf32> to vector<16x16xf32>
    %140 = arith.subf %137, %139 : vector<16x16xf32>
    %c5_i32_99 = arith.constant 5 : i32
    %141 = vector.broadcast %c5_i32_99 : i32 to vector<16x16xi32>
    %142 = arith.cmpi eq, %58, %141 : vector<16x16xi32>
    %cst_100 = arith.constant 0.000000e+00 : f32
    %143 = vector.broadcast %cst_100 : f32 to vector<16x16xf32>
    %144 = arith.select %142, %140, %143 : vector<16x16xi1>, vector<16x16xf32>
    %145 = arith.addf %130, %144 : vector<16x16xf32>
    %c1_i32_101 = arith.constant 1 : i32
    %146 = vector.broadcast %c1_i32_101 : i32 to vector<16x16xi32>
    %147 = arith.cmpi eq, %58, %146 : vector<16x16xi32>
    %cst_102 = arith.constant 0.000000e+00 : f32
    %148 = vector.broadcast %cst_102 : f32 to vector<16x16xf32>
    %149 = arith.select %147, %140, %148 : vector<16x16xi1>, vector<16x16xf32>
    %150 = arith.addf %135, %149 : vector<16x16xf32>
    %c1_103 = arith.constant 1 : index
    %c0_104 = arith.constant 0 : index
    %c0_105 = arith.constant 0 : index
    %151 = vector.load %arg1[%c1_103, %c0_104, %c0_105] : memref<2x16x16xf32, #tpu.memory_space<vmem>>, vector<1x16x16xf32>
    %152 = vector.shape_cast %151 : vector<1x16x16xf32> to vector<16x16xf32>
    %c1_106 = arith.constant 1 : index
    %c1_107 = arith.constant 1 : index
    %c0_108 = arith.constant 0 : index
    %153 = vector.load %arg4[%c1_106, %c1_107, %c0_108] : memref<2x18x18xf32, #tpu.memory_space<vmem>>, vector<1x16x16xf32>
    %154 = vector.shape_cast %153 : vector<1x16x16xf32> to vector<16x16xf32>
    %155 = arith.subf %152, %154 : vector<16x16xf32>
    %c6_i32_109 = arith.constant 6 : i32
    %156 = vector.broadcast %c6_i32_109 : i32 to vector<16x16xi32>
    %157 = arith.cmpi eq, %58, %156 : vector<16x16xi32>
    %cst_110 = arith.constant 0.000000e+00 : f32
    %158 = vector.broadcast %cst_110 : f32 to vector<16x16xf32>
    %159 = arith.select %157, %155, %158 : vector<16x16xi1>, vector<16x16xf32>
    %160 = arith.addf %145, %159 : vector<16x16xf32>
    %c2_i32_111 = arith.constant 2 : i32
    %161 = vector.broadcast %c2_i32_111 : i32 to vector<16x16xi32>
    %162 = arith.cmpi eq, %58, %161 : vector<16x16xi32>
    %cst_112 = arith.constant 0.000000e+00 : f32
    %163 = vector.broadcast %cst_112 : f32 to vector<16x16xf32>
    %164 = arith.select %162, %155, %163 : vector<16x16xi1>, vector<16x16xf32>
    %165 = arith.addf %150, %164 : vector<16x16xf32>
    %c1_113 = arith.constant 1 : index
    %c0_114 = arith.constant 0 : index
    %c0_115 = arith.constant 0 : index
    %166 = vector.load %arg1[%c1_113, %c0_114, %c0_115] : memref<2x16x16xf32, #tpu.memory_space<vmem>>, vector<1x16x16xf32>
    %167 = vector.shape_cast %166 : vector<1x16x16xf32> to vector<16x16xf32>
    %c1_116 = arith.constant 1 : index
    %c0_117 = arith.constant 0 : index
    %c1_118 = arith.constant 1 : index
    %168 = vector.load %arg4[%c1_116, %c0_117, %c1_118] : memref<2x18x18xf32, #tpu.memory_space<vmem>>, vector<1x16x16xf32>
    %169 = vector.shape_cast %168 : vector<1x16x16xf32> to vector<16x16xf32>
    %170 = arith.subf %167, %169 : vector<16x16xf32>
    %c7_i32_119 = arith.constant 7 : i32
    %171 = vector.broadcast %c7_i32_119 : i32 to vector<16x16xi32>
    %172 = arith.cmpi eq, %58, %171 : vector<16x16xi32>
    %cst_120 = arith.constant 0.000000e+00 : f32
    %173 = vector.broadcast %cst_120 : f32 to vector<16x16xf32>
    %174 = arith.select %172, %170, %173 : vector<16x16xi1>, vector<16x16xf32>
    %175 = arith.addf %160, %174 : vector<16x16xf32>
    %c3_i32_121 = arith.constant 3 : i32
    %176 = vector.broadcast %c3_i32_121 : i32 to vector<16x16xi32>
    %177 = arith.cmpi eq, %58, %176 : vector<16x16xi32>
    %cst_122 = arith.constant 0.000000e+00 : f32
    %178 = vector.broadcast %cst_122 : f32 to vector<16x16xf32>
    %179 = arith.select %177, %170, %178 : vector<16x16xi1>, vector<16x16xf32>
    %180 = arith.addf %165, %179 : vector<16x16xf32>
    %c0_123 = arith.constant 0 : index
    %c0_124 = arith.constant 0 : index
    %c0_125 = arith.constant 0 : index
    %181 = vector.load %arg1[%c0_123, %c0_124, %c0_125] : memref<2x16x16xf32, #tpu.memory_space<vmem>>, vector<1x16x16xf32>
    %182 = vector.shape_cast %181 : vector<1x16x16xf32> to vector<16x16xf32>
    %183 = arith.minimumf %175, %180 : vector<16x16xf32>
    %cst_126 = arith.constant 0.000000e+00 : f32
    %184 = vector.broadcast %cst_126 : f32 to vector<16x16xf32>
    %185 = arith.cmpf ogt, %183, %184 : vector<16x16xf32>
    %cst_127 = arith.constant 0.000000e+00 : f32
    %186 = vector.broadcast %cst_127 : f32 to vector<16x16xf32>
    %187 = arith.select %185, %182, %186 : vector<16x16xi1>, vector<16x16xf32>
    %188 = vector.broadcast %1 : f32 to vector<16x16xf32>
    %189 = arith.cmpf ogt, %187, %188 : vector<16x16xf32>
    %190 = arith.extui %189 : vector<16x16xi1> to vector<16x16xi32>
    %191 = arith.sitofp %190 : vector<16x16xi32> to vector<16x16xf32>
    %c1_128 = arith.constant 1 : index
    %c1_129 = arith.constant 1 : index
    %192 = vector.load %arg5[%c1_128, %c1_129] : memref<18x18xf32, #tpu.memory_space<vmem>>, vector<16x16xf32>
    tpu.vector_store %arg5[%c1_128, %c1_129], %191 {strides = array<i32>} : memref<18x18xf32, #tpu.memory_space<vmem>>, vector<16x16xf32>,
    %cst_130 = arith.constant 0.000000e+00 : f32
    %193 = vector.broadcast %cst_130 : f32 to vector<16x16xf32>
    %c0_131 = arith.constant 0 : index
    %c0_132 = arith.constant 0 : index
    %194 = vector.load %arg5[%c0_131, %c0_132] : memref<18x18xf32, #tpu.memory_space<vmem>>, vector<16x16xf32>
    %195 = arith.addf %193, %194 : vector<16x16xf32>
    %c0_133 = arith.constant 0 : index
    %c1_134 = arith.constant 1 : index
    %196 = vector.load %arg5[%c0_133, %c1_134] : memref<18x18xf32, #tpu.memory_space<vmem>>, vector<16x16xf32>
    %197 = arith.addf %195, %196 : vector<16x16xf32>
    %c0_135 = arith.constant 0 : index
    %c2_136 = arith.constant 2 : index
    %198 = vector.load %arg5[%c0_135, %c2_136] : memref<18x18xf32, #tpu.memory_space<vmem>>, vector<16x16xf32>
    %199 = arith.addf %197, %198 : vector<16x16xf32>
    %c1_137 = arith.constant 1 : index
    %c0_138 = arith.constant 0 : index
    %200 = vector.load %arg5[%c1_137, %c0_138] : memref<18x18xf32, #tpu.memory_space<vmem>>, vector<16x16xf32>
    %201 = arith.addf %199, %200 : vector<16x16xf32>
    %c1_139 = arith.constant 1 : index
    %c2_140 = arith.constant 2 : index
    %202 = vector.load %arg5[%c1_139, %c2_140] : memref<18x18xf32, #tpu.memory_space<vmem>>, vector<16x16xf32>
    %203 = arith.addf %201, %202 : vector<16x16xf32>
    %c2_141 = arith.constant 2 : index
    %c0_142 = arith.constant 0 : index
    %204 = vector.load %arg5[%c2_141, %c0_142] : memref<18x18xf32, #tpu.memory_space<vmem>>, vector<16x16xf32>
    %205 = arith.addf %203, %204 : vector<16x16xf32>
    %c2_143 = arith.constant 2 : index
    %c1_144 = arith.constant 1 : index
    %206 = vector.load %arg5[%c2_143, %c1_144] : memref<18x18xf32, #tpu.memory_space<vmem>>, vector<16x16xf32>
    %207 = arith.addf %205, %206 : vector<16x16xf32>
    %c2_145 = arith.constant 2 : index
    %c2_146 = arith.constant 2 : index
    %208 = vector.load %arg5[%c2_145, %c2_146] : memref<18x18xf32, #tpu.memory_space<vmem>>, vector<16x16xf32>
    %209 = arith.addf %207, %208 : vector<16x16xf32>
    %210 = vector.broadcast %0 : f32 to vector<16x16xf32>
    %211 = arith.cmpf oge, %187, %210 : vector<16x16xf32>
    %212 = vector.broadcast %1 : f32 to vector<16x16xf32>
    %213 = arith.cmpf ole, %187, %212 : vector<16x16xf32>
    %214 = arith.andi %211, %213 : vector<16x16xi1>
    %cst_147 = arith.constant 0.000000e+00 : f32
    %215 = vector.broadcast %cst_147 : f32 to vector<16x16xf32>
    %216 = arith.cmpf ogt, %209, %215 : vector<16x16xf32>
    %217 = arith.andi %214, %216 : vector<16x16xi1>
    %218 = arith.ori %189, %217 : vector<16x16xi1>
    %219 = arith.andi %218, %56 : vector<16x16xi1>
    %220 = arith.extui %219 : vector<16x16xi1> to vector<16x16xi32>
    %221 = arith.sitofp %220 : vector<16x16xi32> to vector<16x16xf32>
    %c0_148 = arith.constant 0 : index
    %c0_149 = arith.constant 0 : index
    %c0_150 = arith.constant 0 : index
    %c0_151 = arith.constant 0 : index
    %222 = vector.load %arg3[%c0_148, %c0_149, %c0_150, %c0_151] : memref<2x1x16x16xf32, #tpu.memory_space<vmem>>, vector<1x1x16x16xf32>
    %223 = vector.shape_cast %222 : vector<1x1x16x16xf32> to vector<16x16xf32>
    %224 = vector.shape_cast %221 : vector<16x16xf32> to vector<1x1x16x16xf32>
    tpu.vector_store %arg3[%c0_148, %c0_149, %c0_150, %c0_151], %224 {strides = array<i32>} : memref<2x1x16x16xf32, #tpu.memory_space<vmem>>, vector<1x1x16x16xf32>,
    %225 = vector.extract_strided_slice %43 {offsets = [1, 0, 0], sizes = [1, 16, 16], strides = [1, 1, 1]} : vector<2x16x16xi32> to vector<1x16x16xi32>
    %226 = vector.shape_cast %225 : vector<1x16x16xi32> to vector<16x16xi32>
    %cst_152 = arith.constant 0.000000e+00 : f32
    %227 = vector.broadcast %cst_152 : f32 to vector<16x16xf32>
    %cst_153 = arith.constant 0.000000e+00 : f32
    %228 = vector.broadcast %cst_153 : f32 to vector<16x16xf32>
    %c0_154 = arith.constant 0 : index
    %c0_155 = arith.constant 0 : index
    %c0_156 = arith.constant 0 : index
    %229 = vector.load %arg1[%c0_154, %c0_155, %c0_156] : memref<2x16x16xf32, #tpu.memory_space<vmem>>, vector<1x16x16xf32>
    %230 = vector.shape_cast %229 : vector<1x16x16xf32> to vector<16x16xf32>
    %c0_157 = arith.constant 0 : index
    %c2_158 = arith.constant 2 : index
    %c2_159 = arith.constant 2 : index
    %231 = vector.load %arg4[%c0_157, %c2_158, %c2_159] : memref<2x18x18xf32, #tpu.memory_space<vmem>>, vector<1x16x16xf32>
    %232 = vector.shape_cast %231 : vector<1x16x16xf32> to vector<16x16xf32>
    %233 = arith.subf %230, %232 : vector<16x16xf32>
    %c0_i32_160 = arith.constant 0 : i32
    %234 = vector.broadcast %c0_i32_160 : i32 to vector<16x16xi32>
    %235 = arith.cmpi eq, %226, %234 : vector<16x16xi32>
    %cst_161 = arith.constant 0.000000e+00 : f32
    %236 = vector.broadcast %cst_161 : f32 to vector<16x16xf32>
    %237 = arith.select %235, %233, %236 : vector<16x16xi1>, vector<16x16xf32>
    %238 = arith.addf %227, %237 : vector<16x16xf32>
    %c4_i32_162 = arith.constant 4 : i32
    %239 = vector.broadcast %c4_i32_162 : i32 to vector<16x16xi32>
    %240 = arith.cmpi eq, %226, %239 : vector<16x16xi32>
    %cst_163 = arith.constant 0.000000e+00 : f32
    %241 = vector.broadcast %cst_163 : f32 to vector<16x16xf32>
    %242 = arith.select %240, %233, %241 : vector<16x16xi1>, vector<16x16xf32>
    %243 = arith.addf %228, %242 : vector<16x16xf32>
    %c0_164 = arith.constant 0 : index
    %c0_165 = arith.constant 0 : index
    %c0_166 = arith.constant 0 : index
    %244 = vector.load %arg1[%c0_164, %c0_165, %c0_166] : memref<2x16x16xf32, #tpu.memory_space<vmem>>, vector<1x16x16xf32>
    %245 = vector.shape_cast %244 : vector<1x16x16xf32> to vector<16x16xf32>
    %c0_167 = arith.constant 0 : index
    %c2_168 = arith.constant 2 : index
    %c0_169 = arith.constant 0 : index
    %246 = vector.load %arg4[%c0_167, %c2_168, %c0_169] : memref<2x18x18xf32, #tpu.memory_space<vmem>>, vector<1x16x16xf32>
    %247 = vector.shape_cast %246 : vector<1x16x16xf32> to vector<16x16xf32>
    %248 = arith.subf %245, %247 : vector<16x16xf32>
    %c1_i32_170 = arith.constant 1 : i32
    %249 = vector.broadcast %c1_i32_170 : i32 to vector<16x16xi32>
    %250 = arith.cmpi eq, %226, %249 : vector<16x16xi32>
    %cst_171 = arith.constant 0.000000e+00 : f32
    %251 = vector.broadcast %cst_171 : f32 to vector<16x16xf32>
    %252 = arith.select %250, %248, %251 : vector<16x16xi1>, vector<16x16xf32>
    %253 = arith.addf %238, %252 : vector<16x16xf32>
    %c5_i32_172 = arith.constant 5 : i32
    %254 = vector.broadcast %c5_i32_172 : i32 to vector<16x16xi32>
    %255 = arith.cmpi eq, %226, %254 : vector<16x16xi32>
    %cst_173 = arith.constant 0.000000e+00 : f32
    %256 = vector.broadcast %cst_173 : f32 to vector<16x16xf32>
    %257 = arith.select %255, %248, %256 : vector<16x16xi1>, vector<16x16xf32>
    %258 = arith.addf %243, %257 : vector<16x16xf32>
    %c0_174 = arith.constant 0 : index
    %c0_175 = arith.constant 0 : index
    %c0_176 = arith.constant 0 : index
    %259 = vector.load %arg1[%c0_174, %c0_175, %c0_176] : memref<2x16x16xf32, #tpu.memory_space<vmem>>, vector<1x16x16xf32>
    %260 = vector.shape_cast %259 : vector<1x16x16xf32> to vector<16x16xf32>
    %c0_177 = arith.constant 0 : index
    %c0_178 = arith.constant 0 : index
    %c0_179 = arith.constant 0 : index
    %261 = vector.load %arg4[%c0_177, %c0_178, %c0_179] : memref<2x18x18xf32, #tpu.memory_space<vmem>>, vector<1x16x16xf32>
    %262 = vector.shape_cast %261 : vector<1x16x16xf32> to vector<16x16xf32>
    %263 = arith.subf %260, %262 : vector<16x16xf32>
    %c2_i32_180 = arith.constant 2 : i32
    %264 = vector.broadcast %c2_i32_180 : i32 to vector<16x16xi32>
    %265 = arith.cmpi eq, %226, %264 : vector<16x16xi32>
    %cst_181 = arith.constant 0.000000e+00 : f32
    %266 = vector.broadcast %cst_181 : f32 to vector<16x16xf32>
    %267 = arith.select %265, %263, %266 : vector<16x16xi1>, vector<16x16xf32>
    %268 = arith.addf %253, %267 : vector<16x16xf32>
    %c6_i32_182 = arith.constant 6 : i32
    %269 = vector.broadcast %c6_i32_182 : i32 to vector<16x16xi32>
    %270 = arith.cmpi eq, %226, %269 : vector<16x16xi32>
    %cst_183 = arith.constant 0.000000e+00 : f32
    %271 = vector.broadcast %cst_183 : f32 to vector<16x16xf32>
    %272 = arith.select %270, %263, %271 : vector<16x16xi1>, vector<16x16xf32>
    %273 = arith.addf %258, %272 : vector<16x16xf32>
    %c0_184 = arith.constant 0 : index
    %c0_185 = arith.constant 0 : index
    %c0_186 = arith.constant 0 : index
    %274 = vector.load %arg1[%c0_184, %c0_185, %c0_186] : memref<2x16x16xf32, #tpu.memory_space<vmem>>, vector<1x16x16xf32>
    %275 = vector.shape_cast %274 : vector<1x16x16xf32> to vector<16x16xf32>
    %c0_187 = arith.constant 0 : index
    %c0_188 = arith.constant 0 : index
    %c2_189 = arith.constant 2 : index
    %276 = vector.load %arg4[%c0_187, %c0_188, %c2_189] : memref<2x18x18xf32, #tpu.memory_space<vmem>>, vector<1x16x16xf32>
    %277 = vector.shape_cast %276 : vector<1x16x16xf32> to vector<16x16xf32>
    %278 = arith.subf %275, %277 : vector<16x16xf32>
    %c3_i32_190 = arith.constant 3 : i32
    %279 = vector.broadcast %c3_i32_190 : i32 to vector<16x16xi32>
    %280 = arith.cmpi eq, %226, %279 : vector<16x16xi32>
    %cst_191 = arith.constant 0.000000e+00 : f32
    %281 = vector.broadcast %cst_191 : f32 to vector<16x16xf32>
    %282 = arith.select %280, %278, %281 : vector<16x16xi1>, vector<16x16xf32>
    %283 = arith.addf %268, %282 : vector<16x16xf32>
    %c7_i32_192 = arith.constant 7 : i32
    %284 = vector.broadcast %c7_i32_192 : i32 to vector<16x16xi32>
    %285 = arith.cmpi eq, %226, %284 : vector<16x16xi32>
    %cst_193 = arith.constant 0.000000e+00 : f32
    %286 = vector.broadcast %cst_193 : f32 to vector<16x16xf32>
    %287 = arith.select %285, %278, %286 : vector<16x16xi1>, vector<16x16xf32>
    %288 = arith.addf %273, %287 : vector<16x16xf32>
    %c1_194 = arith.constant 1 : index
    %c0_195 = arith.constant 0 : index
    %c0_196 = arith.constant 0 : index
    %289 = vector.load %arg1[%c1_194, %c0_195, %c0_196] : memref<2x16x16xf32, #tpu.memory_space<vmem>>, vector<1x16x16xf32>
    %290 = vector.shape_cast %289 : vector<1x16x16xf32> to vector<16x16xf32>
    %c1_197 = arith.constant 1 : index
    %c2_198 = arith.constant 2 : index
    %c2_199 = arith.constant 2 : index
    %291 = vector.load %arg4[%c1_197, %c2_198, %c2_199] : memref<2x18x18xf32, #tpu.memory_space<vmem>>, vector<1x16x16xf32>
    %292 = vector.shape_cast %291 : vector<1x16x16xf32> to vector<16x16xf32>
    %293 = arith.subf %290, %292 : vector<16x16xf32>
    %c4_i32_200 = arith.constant 4 : i32
    %294 = vector.broadcast %c4_i32_200 : i32 to vector<16x16xi32>
    %295 = arith.cmpi eq, %226, %294 : vector<16x16xi32>
    %cst_201 = arith.constant 0.000000e+00 : f32
    %296 = vector.broadcast %cst_201 : f32 to vector<16x16xf32>
    %297 = arith.select %295, %293, %296 : vector<16x16xi1>, vector<16x16xf32>
    %298 = arith.addf %283, %297 : vector<16x16xf32>
    %c0_i32_202 = arith.constant 0 : i32
    %299 = vector.broadcast %c0_i32_202 : i32 to vector<16x16xi32>
    %300 = arith.cmpi eq, %226, %299 : vector<16x16xi32>
    %cst_203 = arith.constant 0.000000e+00 : f32
    %301 = vector.broadcast %cst_203 : f32 to vector<16x16xf32>
    %302 = arith.select %300, %293, %301 : vector<16x16xi1>, vector<16x16xf32>
    %303 = arith.addf %288, %302 : vector<16x16xf32>
    %c1_204 = arith.constant 1 : index
    %c0_205 = arith.constant 0 : index
    %c0_206 = arith.constant 0 : index
    %304 = vector.load %arg1[%c1_204, %c0_205, %c0_206] : memref<2x16x16xf32, #tpu.memory_space<vmem>>, vector<1x16x16xf32>
    %305 = vector.shape_cast %304 : vector<1x16x16xf32> to vector<16x16xf32>
    %c1_207 = arith.constant 1 : index
    %c2_208 = arith.constant 2 : index
    %c0_209 = arith.constant 0 : index
    %306 = vector.load %arg4[%c1_207, %c2_208, %c0_209] : memref<2x18x18xf32, #tpu.memory_space<vmem>>, vector<1x16x16xf32>
    %307 = vector.shape_cast %306 : vector<1x16x16xf32> to vector<16x16xf32>
    %308 = arith.subf %305, %307 : vector<16x16xf32>
    %c5_i32_210 = arith.constant 5 : i32
    %309 = vector.broadcast %c5_i32_210 : i32 to vector<16x16xi32>
    %310 = arith.cmpi eq, %226, %309 : vector<16x16xi32>
    %cst_211 = arith.constant 0.000000e+00 : f32
    %311 = vector.broadcast %cst_211 : f32 to vector<16x16xf32>
    %312 = arith.select %310, %308, %311 : vector<16x16xi1>, vector<16x16xf32>
    %313 = arith.addf %298, %312 : vector<16x16xf32>
    %c1_i32_212 = arith.constant 1 : i32
    %314 = vector.broadcast %c1_i32_212 : i32 to vector<16x16xi32>
    %315 = arith.cmpi eq, %226, %314 : vector<16x16xi32>
    %cst_213 = arith.constant 0.000000e+00 : f32
    %316 = vector.broadcast %cst_213 : f32 to vector<16x16xf32>
    %317 = arith.select %315, %308, %316 : vector<16x16xi1>, vector<16x16xf32>
    %318 = arith.addf %303, %317 : vector<16x16xf32>
    %c1_214 = arith.constant 1 : index
    %c0_215 = arith.constant 0 : index
    %c0_216 = arith.constant 0 : index
    %319 = vector.load %arg1[%c1_214, %c0_215, %c0_216] : memref<2x16x16xf32, #tpu.memory_space<vmem>>, vector<1x16x16xf32>
    %320 = vector.shape_cast %319 : vector<1x16x16xf32> to vector<16x16xf32>
    %c1_217 = arith.constant 1 : index
    %c0_218 = arith.constant 0 : index
    %c0_219 = arith.constant 0 : index
    %321 = vector.load %arg4[%c1_217, %c0_218, %c0_219] : memref<2x18x18xf32, #tpu.memory_space<vmem>>, vector<1x16x16xf32>
    %322 = vector.shape_cast %321 : vector<1x16x16xf32> to vector<16x16xf32>
    %323 = arith.subf %320, %322 : vector<16x16xf32>
    %c6_i32_220 = arith.constant 6 : i32
    %324 = vector.broadcast %c6_i32_220 : i32 to vector<16x16xi32>
    %325 = arith.cmpi eq, %226, %324 : vector<16x16xi32>
    %cst_221 = arith.constant 0.000000e+00 : f32
    %326 = vector.broadcast %cst_221 : f32 to vector<16x16xf32>
    %327 = arith.select %325, %323, %326 : vector<16x16xi1>, vector<16x16xf32>
    %328 = arith.addf %313, %327 : vector<16x16xf32>
    %c2_i32_222 = arith.constant 2 : i32
    %329 = vector.broadcast %c2_i32_222 : i32 to vector<16x16xi32>
    %330 = arith.cmpi eq, %226, %329 : vector<16x16xi32>
    %cst_223 = arith.constant 0.000000e+00 : f32
    %331 = vector.broadcast %cst_223 : f32 to vector<16x16xf32>
    %332 = arith.select %330, %323, %331 : vector<16x16xi1>, vector<16x16xf32>
    %333 = arith.addf %318, %332 : vector<16x16xf32>
    %c1_224 = arith.constant 1 : index
    %c0_225 = arith.constant 0 : index
    %c0_226 = arith.constant 0 : index
    %334 = vector.load %arg1[%c1_224, %c0_225, %c0_226] : memref<2x16x16xf32, #tpu.memory_space<vmem>>, vector<1x16x16xf32>
    %335 = vector.shape_cast %334 : vector<1x16x16xf32> to vector<16x16xf32>
    %c1_227 = arith.constant 1 : index
    %c0_228 = arith.constant 0 : index
    %c2_229 = arith.constant 2 : index
    %336 = vector.load %arg4[%c1_227, %c0_228, %c2_229] : memref<2x18x18xf32, #tpu.memory_space<vmem>>, vector<1x16x16xf32>
    %337 = vector.shape_cast %336 : vector<1x16x16xf32> to vector<16x16xf32>
    %338 = arith.subf %335, %337 : vector<16x16xf32>
    %c7_i32_230 = arith.constant 7 : i32
    %339 = vector.broadcast %c7_i32_230 : i32 to vector<16x16xi32>
    %340 = arith.cmpi eq, %226, %339 : vector<16x16xi32>
    %cst_231 = arith.constant 0.000000e+00 : f32
    %341 = vector.broadcast %cst_231 : f32 to vector<16x16xf32>
    %342 = arith.select %340, %338, %341 : vector<16x16xi1>, vector<16x16xf32>
    %343 = arith.addf %328, %342 : vector<16x16xf32>
    %c3_i32_232 = arith.constant 3 : i32
    %344 = vector.broadcast %c3_i32_232 : i32 to vector<16x16xi32>
    %345 = arith.cmpi eq, %226, %344 : vector<16x16xi32>
    %cst_233 = arith.constant 0.000000e+00 : f32
    %346 = vector.broadcast %cst_233 : f32 to vector<16x16xf32>
    %347 = arith.select %345, %338, %346 : vector<16x16xi1>, vector<16x16xf32>
    %348 = arith.addf %333, %347 : vector<16x16xf32>
    %c1_234 = arith.constant 1 : index
    %c0_235 = arith.constant 0 : index
    %c0_236 = arith.constant 0 : index
    %349 = vector.load %arg1[%c1_234, %c0_235, %c0_236] : memref<2x16x16xf32, #tpu.memory_space<vmem>>, vector<1x16x16xf32>
    %350 = vector.shape_cast %349 : vector<1x16x16xf32> to vector<16x16xf32>
    %351 = arith.minimumf %343, %348 : vector<16x16xf32>
    %cst_237 = arith.constant 0.000000e+00 : f32
    %352 = vector.broadcast %cst_237 : f32 to vector<16x16xf32>
    %353 = arith.cmpf ogt, %351, %352 : vector<16x16xf32>
    %cst_238 = arith.constant 0.000000e+00 : f32
    %354 = vector.broadcast %cst_238 : f32 to vector<16x16xf32>
    %355 = arith.select %353, %350, %354 : vector<16x16xi1>, vector<16x16xf32>
    %356 = vector.broadcast %1 : f32 to vector<16x16xf32>
    %357 = arith.cmpf ogt, %355, %356 : vector<16x16xf32>
    %358 = arith.extui %357 : vector<16x16xi1> to vector<16x16xi32>
    %359 = arith.sitofp %358 : vector<16x16xi32> to vector<16x16xf32>
    %c1_239 = arith.constant 1 : index
    %c1_240 = arith.constant 1 : index
    %360 = vector.load %arg5[%c1_239, %c1_240] : memref<18x18xf32, #tpu.memory_space<vmem>>, vector<16x16xf32>
    tpu.vector_store %arg5[%c1_239, %c1_240], %359 {strides = array<i32>} : memref<18x18xf32, #tpu.memory_space<vmem>>, vector<16x16xf32>,
    %cst_241 = arith.constant 0.000000e+00 : f32
    %361 = vector.broadcast %cst_241 : f32 to vector<16x16xf32>
    %c0_242 = arith.constant 0 : index
    %c0_243 = arith.constant 0 : index
    %362 = vector.load %arg5[%c0_242, %c0_243] : memref<18x18xf32, #tpu.memory_space<vmem>>, vector<16x16xf32>
    %363 = arith.addf %361, %362 : vector<16x16xf32>
    %c0_244 = arith.constant 0 : index
    %c1_245 = arith.constant 1 : index
    %364 = vector.load %arg5[%c0_244, %c1_245] : memref<18x18xf32, #tpu.memory_space<vmem>>, vector<16x16xf32>
    %365 = arith.addf %363, %364 : vector<16x16xf32>
    %c0_246 = arith.constant 0 : index
    %c2_247 = arith.constant 2 : index
    %366 = vector.load %arg5[%c0_246, %c2_247] : memref<18x18xf32, #tpu.memory_space<vmem>>, vector<16x16xf32>
    %367 = arith.addf %365, %366 : vector<16x16xf32>
    %c1_248 = arith.constant 1 : index
    %c0_249 = arith.constant 0 : index
    %368 = vector.load %arg5[%c1_248, %c0_249] : memref<18x18xf32, #tpu.memory_space<vmem>>, vector<16x16xf32>
    %369 = arith.addf %367, %368 : vector<16x16xf32>
    %c1_250 = arith.constant 1 : index
    %c2_251 = arith.constant 2 : index
    %370 = vector.load %arg5[%c1_250, %c2_251] : memref<18x18xf32, #tpu.memory_space<vmem>>, vector<16x16xf32>
    %371 = arith.addf %369, %370 : vector<16x16xf32>
    %c2_252 = arith.constant 2 : index
    %c0_253 = arith.constant 0 : index
    %372 = vector.load %arg5[%c2_252, %c0_253] : memref<18x18xf32, #tpu.memory_space<vmem>>, vector<16x16xf32>
    %373 = arith.addf %371, %372 : vector<16x16xf32>
    %c2_254 = arith.constant 2 : index
    %c1_255 = arith.constant 1 : index
    %374 = vector.load %arg5[%c2_254, %c1_255] : memref<18x18xf32, #tpu.memory_space<vmem>>, vector<16x16xf32>
    %375 = arith.addf %373, %374 : vector<16x16xf32>
    %c2_256 = arith.constant 2 : index
    %c2_257 = arith.constant 2 : index
    %376 = vector.load %arg5[%c2_256, %c2_257] : memref<18x18xf32, #tpu.memory_space<vmem>>, vector<16x16xf32>
    %377 = arith.addf %375, %376 : vector<16x16xf32>
    %378 = vector.broadcast %0 : f32 to vector<16x16xf32>
    %379 = arith.cmpf oge, %355, %378 : vector<16x16xf32>
    %380 = vector.broadcast %1 : f32 to vector<16x16xf32>
    %381 = arith.cmpf ole, %355, %380 : vector<16x16xf32>
    %382 = arith.andi %379, %381 : vector<16x16xi1>
    %cst_258 = arith.constant 0.000000e+00 : f32
    %383 = vector.broadcast %cst_258 : f32 to vector<16x16xf32>
    %384 = arith.cmpf ogt, %377, %383 : vector<16x16xf32>
    %385 = arith.andi %382, %384 : vector<16x16xi1>
    %386 = arith.ori %357, %385 : vector<16x16xi1>
    %387 = arith.andi %386, %56 : vector<16x16xi1>
    %388 = arith.extui %387 : vector<16x16xi1> to vector<16x16xi32>
    %389 = arith.sitofp %388 : vector<16x16xi32> to vector<16x16xf32>
    %c1_259 = arith.constant 1 : index
    %c0_260 = arith.constant 0 : index
    %c0_261 = arith.constant 0 : index
    %c0_262 = arith.constant 0 : index
    %390 = vector.load %arg3[%c1_259, %c0_260, %c0_261, %c0_262] : memref<2x1x16x16xf32, #tpu.memory_space<vmem>>, vector<1x1x16x16xf32>
    %391 = vector.shape_cast %390 : vector<1x1x16x16xf32> to vector<16x16xf32>
    %392 = vector.shape_cast %389 : vector<16x16xf32> to vector<1x1x16x16xf32>
    tpu.vector_store %arg3[%c1_259, %c0_260, %c0_261, %c0_262], %392 {strides = array<i32>} : memref<2x1x16x16xf32, #tpu.memory_space<vmem>>, vector<1x1x16x16xf32>,
    return
  }
}

</mosaic_0001>

<llo_original>
// kernel: canny_detector.2
$region0: #{canny_detector.2}
  #allocation0 [shape = 'u32[]', space=smem, size = 0x4, offset = 0x4, fixed_abs, tag = 'smem constant byte address 0x4 - core index']
  #allocation1 [shape = 'u32[144,128]{1,0:T(1,128)}', space=vmem, size = 0x12000, scoped, tag = 'internal scratch']
  #allocation2 [shape = 'f32[28,28]{1,0:T(8,128)}', space=vmem, size = 0x4000, scoped, tag = 'scratch operand']
  #allocation3 [shape = 'f32[16,16]{1,0:T(8,128)}', space=vmem, size = 0x2000, scoped, tag = 'scratch operand']
  #allocation4 [shape = 'f32[16,16]{1,0:T(8,128)}', space=vmem, size = 0x2000, scoped, tag = 'scratch operand']
  %s0 = inlined_call_operand.vmem [shape: f32[2,4,16,16], index: 0, kind: input, shape index: {}]
  %s1 = inlined_call_operand.vmem [shape: f32[2,16,16], index: 1, kind: output, shape index: {0}]
  %s2 = inlined_call_operand.vmem [shape: s8[2,16,16], index: 2, kind: output, shape index: {1}]
  %3 = xla_tuple %s1, %s2
  %s4 = sld [smem:[#allocation0]]
  $region53: #{canny_detector.2} parent=0
    _
  %s6 = ssub.s32 1, %s4
  %s7 = scalar_select 0, %s6, %s4
  loop: start=0, step=1, limit=10
  $region2: #{canny_detector.2} parent=0 // loop_pre_header
    _
  $region3: #{canny_detector.2} parent=0 // loop_header
    %s9 = sphi 0, %s13
    %p10 = scmp.ge.s32.totalorder %s9, 10
    %s16 = sphi 0, %s28
    %s17 = sphi 0, %s24
    %s18 = sphi 0, %s16
    %s19 = sphi 0, %s17
    %s20 = sphi 0, %s18
    %s21 = sphi 0, %s19
    %s33 = sphi 0, %s35
    %s36 = sphi 0, %s33
    %s37 = sphi 0, %s36
    %s53 = sphi 0, %s37
    %s59 = sphi 0, %s61
    %s62 = sphi 0, %s59
    %s63 = sphi 0, %s62
    %s79 = sphi 0, %s63
    %s85 = sphi 0, %s87
    %s88 = sphi 0, %s85
    %s89 = sphi 0, %s88
    %s105 = sphi 0, %s89
  $region4: #{canny_detector.2} parent=0 // loop_header_branch
    %12 = sbr.rel (%p10) target = $region8
  $region5: #{canny_detector.2} parent=0 // loop_body
    %s14 = ssub.s32 %s9, 1
    %s15 = ssub.s32 %s9, 2
    %s22 = sadd.s32 1, %s17
    %p23 = scmp.ge.s32.totalorder %s22, 4
    %s24 = scalar_select %p23, 0, %s22
    %s25 = sadd.s32 1, %s16
    %s26 = scalar_select %p23, %s25, %s16
    %p27 = scmp.ge.s32.totalorder %s26, 2
    %s28 = scalar_select %p27, 0, %s26
    %s29 = ssub.s32 %s16, %s28
    %s30 = ssub.s32 %s17, %s24
    %s31 = sor.u32 %s29, %s30
    %p32 = scmp.eq.s32.totalorder %s31, 0
    %s34 = sadd.s32 %s33, 1
    %s35 = scalar_select %p32, %s33, %s34
    %p38 = pneg %p32
    %p39 = scmp.eq.s32.totalorder %s9, 7
    %p40 = por %p38, %p39
    %p41 = scmp.ne.s32.totalorder %s33, %s36
    %p42 = scmp.eq.s32.totalorder %s9, 0
    %p43 = por %p41, %p42
    %p44 = scmp.ne.s32.totalorder %s33, %s36
    %p45 = scmp.eq.s32.totalorder %s14, 7
    %p46 = por %p44, %p45
    %p47 = scmp.ne.s32.totalorder %s36, %s37
    %p48 = scmp.eq.s32.totalorder %s14, 0
    %p49 = por %p47, %p48
    %p50 = scmp.ne.s32.totalorder %s36, %s37
    %p51 = scmp.eq.s32.totalorder %s15, 7
    %p52 = por %p50, %p51
    %p54 = scmp.ne.s32.totalorder %s37, %s53
    %p55 = scmp.eq.s32.totalorder %s15, 0
    %p56 = por %p54, %p55
    %s57 = ssub.s32 %s16, %s28
    %p58 = scmp.eq.s32.totalorder %s57, 0
    %s60 = sadd.s32 %s59, 1
    %s61 = scalar_select %p58, %s59, %s60
    %p64 = pneg %p58
    %p65 = scmp.eq.s32.totalorder %s9, 7
    %p66 = por %p64, %p65
    %p67 = scmp.ne.s32.totalorder %s59, %s62
    %p68 = scmp.eq.s32.totalorder %s9, 0
    %p69 = por %p67, %p68
    %p70 = scmp.ne.s32.totalorder %s59, %s62
    %p71 = scmp.eq.s32.totalorder %s14, 7
    %p72 = por %p70, %p71
    %p73 = scmp.ne.s32.totalorder %s62, %s63
    %p74 = scmp.eq.s32.totalorder %s14, 0
    %p75 = por %p73, %p74
    %p76 = scmp.ne.s32.totalorder %s62, %s63
    %p77 = scmp.eq.s32.totalorder %s15, 7
    %p78 = por %p76, %p77
    %p80 = scmp.ne.s32.totalorder %s63, %s79
    %p81 = scmp.eq.s32.totalorder %s15, 0
    %p82 = por %p80, %p81
    %s83 = ssub.s32 %s16, %s28
    %p84 = scmp.eq.s32.totalorder %s83, 0
    %s86 = sadd.s32 %s85, 1
    %s87 = scalar_select %p84, %s85, %s86
    %p90 = pneg %p84
    %p91 = scmp.eq.s32.totalorder %s9, 7
    %p92 = por %p90, %p91
    %p93 = scmp.ne.s32.totalorder %s85, %s88
    %p94 = scmp.eq.s32.totalorder %s9, 0
    %p95 = por %p93, %p94
    %p96 = scmp.ne.s32.totalorder %s85, %s88
    %p97 = scmp.eq.s32.totalorder %s14, 7
    %p98 = por %p96, %p97
    %p99 = scmp.ne.s32.totalorder %s88, %s89
    %p100 = scmp.eq.s32.totalorder %s14, 0
    %p101 = por %p99, %p100
    %p102 = scmp.ne.s32.totalorder %s88, %s89
    %p103 = scmp.eq.s32.totalorder %s15, 7
    %p104 = por %p102, %p103
    %p106 = scmp.ne.s32.totalorder %s89, %s105
    %p107 = scmp.eq.s32.totalorder %s15, 0
    %p108 = por %p106, %p107
    %p109 = scmp.le.s32.totalorder 1, %s9
    %p110 = scmp.lt.s32.totalorder %s9, 9
    %p111 = pnand %p109, %p110
    %p112 = pneg %p111
    // Predicated region
    $region9: #{canny_detector.2} parent=5 // pred_check
      _
    $region10: #{canny_detector.2} parent=5 // pred_check_branch
      %114 = sbr.rel (%p111) target = $region12
    $region11: #{canny_detector.2} parent=5 // pred_region
      %s115 = ssub.s32 %s9, 1
    $region12: #{canny_detector.2} parent=5 // pred_fallthru
      _
    %p116 = scmp.lt.s32.totalorder %s9, 8
    // Predicated region
    $region13: #{canny_detector.2} parent=5 // pred_check
      %p117 = pneg %p116
    $region14: #{canny_detector.2} parent=5 // pred_check_branch
      %119 = sbr.rel (%p117) target = $region16
    $region15: #{canny_detector.2} parent=5 // pred_region
      // Predicated region
      $region17: #{canny_detector.2} parent=15 // pred_check
        %p120 = pneg %p43
      $region18: #{canny_detector.2} parent=15 // pred_check_branch
        %122 = sbr.rel (%p120) target = $region20
      $region19: #{canny_detector.2} parent=15 // pred_region
        %p123 = scmp.lt.s32.totalorder %s16, 1
        %s124 = scalar_select %p123, %s16, 1
        %p125 = scmp.lt.s32.totalorder %s17, 3
        %s126 = scalar_select %p125, %s17, 3
        %s127 = smul.addr %s126, 2
        %s128 = smul.addr %s124, 8
        %s129 = sadd.s32 %s127, %s128
        %s130 = smul.addr %s129, 8
        %s131 = scalar_lea.vmem %s0, %s130
      $region20: #{canny_detector.2} parent=15 // pred_fallthru
        _
    $region16: #{canny_detector.2} parent=5 // pred_fallthru
      _
    %p132 = scmp.le.s32.totalorder 1, %s9
    %p133 = scmp.lt.s32.totalorder %s9, 9
    %p134 = pnand %p132, %p133
    %p135 = pneg %p134
    // Predicated region
    $region21: #{canny_detector.2} parent=5 // pred_check
      _
    $region22: #{canny_detector.2} parent=5 // pred_check_branch
      %137 = sbr.rel (%p134) target = $region24
    $region23: #{canny_detector.2} parent=5 // pred_region
      %s138 = ssub.s32 %s9, 1
      %p139 = scmp.lt.s32.totalorder %s18, 1
      %s140 = scalar_select %p139, %s18, 1
      %p141 = scmp.lt.s32.totalorder %s19, 3
      %s142 = scalar_select %p141, %s19, 3
      %s143 = smul.addr %s142, 2
      %s144 = smul.addr %s140, 8
      %s145 = sadd.s32 %s143, %s144
      %s146 = smul.addr %s145, 8
      %s147 = scalar_lea.vmem %s0, %s146
      %p148 = pneg %p49
      %p149 = pneg %p46
      %p150 = pneg %p75
      %p151 = pneg %p72
      %p152 = scmp.lt.s32.totalorder %s18, 1
      %s153 = scalar_select %p152, %s18, 1
      %s154 = smul.addr %s153, 2
      %s155 = smul.addr %s154, 8
      %s156 = scalar_lea.vmem %s1, %s155
      %p157 = pneg %p101
      %p158 = pneg %p98
      %p159 = scmp.lt.s32.totalorder %s18, 1
      %s160 = scalar_select %p159, %s18, 1
      %s161 = smul.addr %s160, 2
      %s162 = smul.addr %s161, 2
      %s163 = scalar_lea.vmem %s2, %s162
      %p164 = scmp.lt.s32.totalorder %s18, 1
      %s165 = scalar_select %p164, %s18, 1
      %p166 = scmp.lt.s32.totalorder %s19, 3
      %s167 = scalar_select %p166, %s19, 3
      %s168 = smul.addr %s167, 2
      %s169 = smul.addr %s165, 8
      %s170 = sadd.s32 %s168, %s169
      %s171 = smul.addr %s170, 8
      %s172 = scalar_lea.vmem %s0, %s171
      %p173 = scmp.lt.s32.totalorder %s18, 1
      %s174 = scalar_select %p173, %s18, 1
      %s175 = smul.addr %s174, 2
      %s176 = smul.addr %s175, 8
      %s177 = scalar_lea.vmem %s1, %s176
      %p178 = scmp.lt.s32.totalorder %s18, 1
      %s179 = scalar_select %p178, %s18, 1
      %s180 = smul.addr %s179, 2
      %s181 = smul.addr %s180, 2
      %s182 = scalar_lea.vmem %s2, %s181
      %p183 = scmp.eq.s32.totalorder %s19, 0
      // Predicated region
      $region25: #{canny_detector.2} parent=23 // pred_check
        %p184 = pneg %p183
      $region26: #{canny_detector.2} parent=23 // pred_check_branch
        %186 = sbr.rel (%p184) target = $region28
      $region27: #{canny_detector.2} parent=23 // pred_region
        %vm187 = vcmask 130048
        %188 = vst.msk [vmem:[#allocation3] sm:$0xff] %vm187, 0.0
        %189 = vst.msk [vmem:[#allocation3 + $0x8] sm:$0xff] %vm187, 0.0
        %190 = vst.msk [vmem:[#allocation4] sm:$0xff] %vm187, 0.0
        %191 = vst.msk [vmem:[#allocation4 + $0x8] sm:$0xff] %vm187, 0.0
        %192 = vst.msk [vmem:[%s177] sm:$0xff] %vm187, 0.0
        %193 = vst.msk [vmem:[%s177 + $0x8] sm:$0xff] %vm187, 0.0
        %vm194 = vcmask 226304
        %195 = vst.msk [vmem:[#allocation2] sm:$0x3f] %vm194, 0.0
        %196 = vst.msk [vmem:[#allocation2 + $0x16] sm:$0x3f] %vm194, 0.0
        %vm197 = vcmask 48128
        %198 = vst.msk [vmem:[#allocation2] sm:$0xff] %vm197, 0.0
        %199 = vst.msk [vmem:[#allocation2 + $0x8] sm:$0xff] %vm197, 0.0
        %200 = vst.msk [vmem:[#allocation2 + $0x10] sm:$0xff] %vm197, 0.0
        %vm201 = vcmask 44032
        %202 = vst.msk [vmem:[#allocation2 + $0x18] sm:$0xf] %vm201, 0.0
        %vm203 = vcmask 228528
        %204 = vst.msk [vmem:[#allocation2] sm:$0xff] %vm203, 0.0
        %205 = vst.msk [vmem:[#allocation2 + $0x8] sm:$0xff] %vm203, 0.0
        %206 = vst.msk [vmem:[#allocation2 + $0x10] sm:$0xff] %vm203, 0.0
        %vm207 = vcmask 224432
        %208 = vst.msk [vmem:[#allocation2 + $0x18] sm:$0xf] %vm207, 0.0
      $region28: #{canny_detector.2} parent=23 // pred_fallthru
        _
      %v209 = vld [vmem:[%s172] sm:$0xff]
      %v210 = vld [vmem:[%s172 + $0x8] sm:$0xff]
      %213 = vrot.lane.b32.xlu0 %v209, 6
      %v214 = vpop.permute.xlu0 %213
      %215 = vrot.lane.b32.xlu0 %v210, 6
      %v216 = vpop.permute.xlu0 %215
      %vm219 = vcmask 179248
      %220 = vst.msk [vmem:[#allocation2 + $0x6] sm:$0xff] %vm219, %v214
      %221 = vst.msk [vmem:[#allocation2 + $0xe] sm:$0xff] %vm219, %v216
      %v222 = vld [vmem:[#allocation2 + $0x6] sm:$0xff]
      %v223 = vld [vmem:[#allocation2 + $0xe] sm:$0xff]
      %v224 = vmul.f32 %v222, 0.13533528
      %v225 = vmul.f32 %v223, 0.13533528
      %v226 = vmul.f32 %v222, 0.2493522
      %v227 = vmul.f32 %v223, 0.2493522
      %230 = vrot.lane.b32.xlu0 %v226, 127
      %v231 = vpop.permute.xlu0 %230
      %232 = vrot.lane.b32.xlu0 %v227, 127
      %v233 = vpop.permute.xlu0 %232
      %v236 = vadd.f32 %v224, %v231
      %v237 = vadd.f32 %v225, %v233
      %v238 = vmul.f32 %v222, 0.41111228
      %v239 = vmul.f32 %v223, 0.41111228
      %242 = vrot.lane.b32.xlu0 %v238, 126
      %v243 = vpop.permute.xlu0 %242
      %244 = vrot.lane.b32.xlu0 %v239, 126
      %v245 = vpop.permute.xlu0 %244
      %v248 = vadd.f32 %v236, %v243
      %v249 = vadd.f32 %v237, %v245
      %v250 = vmul.f32 %v222, 0.60653067
      %v251 = vmul.f32 %v223, 0.60653067
      %254 = vrot.lane.b32.xlu0 %v250, 125
      %v255 = vpop.permute.xlu0 %254
      %256 = vrot.lane.b32.xlu0 %v251, 125
      %v257 = vpop.permute.xlu0 %256
      %v260 = vadd.f32 %v248, %v255
      %v261 = vadd.f32 %v249, %v257
      %v262 = vmul.f32 %v222, 0.8007374
      %v263 = vmul.f32 %v223, 0.8007374
      %266 = vrot.lane.b32.xlu0 %v262, 124
      %v267 = vpop.permute.xlu0 %266
      %268 = vrot.lane.b32.xlu0 %v263, 124
      %v269 = vpop.permute.xlu0 %268
      %v272 = vadd.f32 %v260, %v267
      %v273 = vadd.f32 %v261, %v269
      %v274 = vmul.f32 %v222, 0.94595945
      %v275 = vmul.f32 %v223, 0.94595945
      %278 = vrot.lane.b32.xlu0 %v274, 123
      %v279 = vpop.permute.xlu0 %278
      %280 = vrot.lane.b32.xlu0 %v275, 123
      %v281 = vpop.permute.xlu0 %280
      %v284 = vadd.f32 %v272, %v279
      %v285 = vadd.f32 %v273, %v281
      %288 = vrot.lane.b32.xlu0 %v222, 122
      %v289 = vpop.permute.xlu0 %288
      %290 = vrot.lane.b32.xlu0 %v223, 122
      %v291 = vpop.permute.xlu0 %290
      %v294 = vadd.f32 %v284, %v289
      %v295 = vadd.f32 %v285, %v291
      %296 = vrot.lane.b32.xlu0 %v274, 121
      %v297 = vpop.permute.xlu0 %296
      %298 = vrot.lane.b32.xlu0 %v275, 121
      %v299 = vpop.permute.xlu0 %298
      %v302 = vadd.f32 %v294, %v297
      %v303 = vadd.f32 %v295, %v299
      %304 = vrot.lane.b32.xlu0 %v262, 120
      %v305 = vpop.permute.xlu0 %304
      %306 = vrot.lane.b32.xlu0 %v263, 120
      %v307 = vpop.permute.xlu0 %306
      %v310 = vadd.f32 %v302, %v305
      %v311 = vadd.f32 %v303, %v307
      %312 = vrot.lane.b32.xlu0 %v250, 119
      %v313 = vpop.permute.xlu0 %312
      %314 = vrot.lane.b32.xlu0 %v251, 119
      %v315 = vpop.permute.xlu0 %314
      %v318 = vadd.f32 %v310, %v313
      %v319 = vadd.f32 %v311, %v315
      %320 = vrot.lane.b32.xlu0 %v238, 118
      %v321 = vpop.permute.xlu0 %320
      %322 = vrot.lane.b32.xlu0 %v239, 118
      %v323 = vpop.permute.xlu0 %322
      %v326 = vadd.f32 %v318, %v321
      %v327 = vadd.f32 %v319, %v323
      %328 = vrot.lane.b32.xlu0 %v226, 117
      %v329 = vpop.permute.xlu0 %328
      %330 = vrot.lane.b32.xlu0 %v227, 117
      %v331 = vpop.permute.xlu0 %330
      %v334 = vadd.f32 %v326, %v329
      %v335 = vadd.f32 %v327, %v331
      %338 = vrot.lane.b32.xlu0 %v224, 116
      %v339 = vpop.permute.xlu0 %338
      %340 = vrot.lane.b32.xlu0 %v225, 116
      %v341 = vpop.permute.xlu0 %340
      %v344 = vadd.f32 %v334, %v339
      %v345 = vadd.f32 %v335, %v341
      %348 = vrot.lane.b32.xlu0 %v344, 6
      %v349 = vpop.permute.xlu0 %348
      %350 = vrot.lane.b32.xlu0 %v345, 6
      %v351 = vpop.permute.xlu0 %350
      %354 = vst.msk [vmem:[#allocation2 + $0x6] sm:$0xff] %vm219, %v349
      %355 = vst.msk [vmem:[#allocation2 + $0xe] sm:$0xff] %vm219, %v351
      %v356 = vld [vmem:[#allocation2] sm:$0xff]
      %v357 = vld [vmem:[#allocation2 + $0x8] sm:$0xff]
      %v358 = vmul.f32 %v356, 0.13533528
      %v359 = vmul.f32 %v357, 0.13533528
      %v360 = vld [vmem:[#allocation2 + $0x1] sm:$0xff]
      %v361 = vld [vmem:[#allocation2 + $0x9] sm:$0xff]
      %v362 = vmul.f32 %v360, 0.2493522
      %v363 = vmul.f32 %v361, 0.2493522
      %v364 = vadd.f32 %v358, %v362
      %v365 = vadd.f32 %v359, %v363
      %v366 = vld [vmem:[#allocation2 + $0x2] sm:$0xff]
      %v367 = vld [vmem:[#allocation2 + $0xa] sm:$0xff]
      %v368 = vmul.f32 %v366, 0.41111228
      %v369 = vmul.f32 %v367, 0.41111228
      %v370 = vadd.f32 %v364, %v368
      %v371 = vadd.f32 %v365, %v369
      %v372 = vld [vmem:[#allocation2 + $0x3] sm:$0xff]
      %v373 = vld [vmem:[#allocation2 + $0xb] sm:$0xff]
      %v374 = vmul.f32 %v372, 0.60653067
      %v375 = vmul.f32 %v373, 0.60653067
      %v376 = vadd.f32 %v370, %v374
      %v377 = vadd.f32 %v371, %v375
      %v378 = vld [vmem:[#allocation2 + $0x4] sm:$0xff]
      %v379 = vld [vmem:[#allocation2 + $0xc] sm:$0xff]
      %v380 = vmul.f32 %v378, 0.8007374
      %v381 = vmul.f32 %v379, 0.8007374
      %v382 = vadd.f32 %v376, %v380
      %v383 = vadd.f32 %v377, %v381
      %v384 = vld [vmem:[#allocation2 + $0x5] sm:$0xff]
      %v385 = vld [vmem:[#allocation2 + $0xd] sm:$0xff]
      %v386 = vmul.f32 %v384, 0.94595945
      %v387 = vmul.f32 %v385, 0.94595945
      %v388 = vadd.f32 %v382, %v386
      %v389 = vadd.f32 %v383, %v387
      %v390 = vld [vmem:[#allocation2 + $0x6] sm:$0xff]
      %v391 = vld [vmem:[#allocation2 + $0xe] sm:$0xff]
      %v392 = vadd.f32 %v388, %v390
      %v393 = vadd.f32 %v389, %v391
      %v394 = vld [vmem:[#allocation2 + $0x7] sm:$0xff]
      %v395 = vld [vmem:[#allocation2 + $0xf] sm:$0xff]
      %v396 = vmul.f32 %v394, 0.94595945
      %v397 = vmul.f32 %v395, 0.94595945
      %v398 = vadd.f32 %v392, %v396
      %v399 = vadd.f32 %v393, %v397
      %v400 = vld [vmem:[#allocation2 + $0x10] sm:$0xff]
      %v401 = vmul.f32 %v357, 0.8007374
      %v402 = vmul.f32 %v400, 0.8007374
      %v403 = vadd.f32 %v398, %v401
      %v404 = vadd.f32 %v399, %v402
      %v405 = vld [vmem:[#allocation2 + $0x11] sm:$0xff]
      %v406 = vmul.f32 %v361, 0.60653067
      %v407 = vmul.f32 %v405, 0.60653067
      %v408 = vadd.f32 %v403, %v406
      %v409 = vadd.f32 %v404, %v407
      %v410 = vld [vmem:[#allocation2 + $0x12] sm:$0xff]
      %v411 = vmul.f32 %v410, 0.41111228
      %v412 = vadd.f32 %v408, %v369
      %v413 = vadd.f32 %v409, %v411
      %v414 = vld [vmem:[#allocation2 + $0x13] sm:$0xff]
      %v415 = vmul.f32 %v373, 0.2493522
      %v416 = vmul.f32 %v414, 0.2493522
      %v417 = vadd.f32 %v412, %v415
      %v418 = vadd.f32 %v413, %v416
      %v419 = vld [vmem:[#allocation2 + $0x14] sm:$0xff]
      %v420 = vmul.f32 %v379, 0.13533528
      %v421 = vmul.f32 %v419, 0.13533528
      %v422 = vadd.f32 %v417, %v420
      %v423 = vadd.f32 %v418, %v421
      %424 = vst.msk [vmem:[#allocation2 + $0x6] sm:$0xff] %vm219, %v422
      %425 = vst.msk [vmem:[#allocation2 + $0xe] sm:$0xff] %vm219, %v423
      %v426 = vld [vmem:[#allocation2 + $0x5] sm:$0xff]
      %v427 = vld [vmem:[#allocation2 + $0xd] sm:$0xff]
      %430 = vrot.lane.b32.xlu0 %v426, 126
      %v431 = vpop.permute.xlu0 %430
      %432 = vrot.lane.b32.xlu0 %v427, 126
      %v433 = vpop.permute.xlu0 %432
      %v436 = vsub.f32 %v426, %v431
      %v437 = vsub.f32 %v427, %v433
      %v438 = vld [vmem:[#allocation2 + $0x6] sm:$0xff]
      %v439 = vld [vmem:[#allocation2 + $0xe] sm:$0xff]
      %442 = vrot.lane.b32.xlu0 %v438, 126
      %v443 = vpop.permute.xlu0 %442
      %444 = vrot.lane.b32.xlu0 %v439, 126
      %v445 = vpop.permute.xlu0 %444
      %v448 = vsub.f32 %v438, %v443
      %v449 = vsub.f32 %v439, %v445
      %v450 = vmul.f32 %v448, 2.0
      %v451 = vmul.f32 %v449, 2.0
      %v452 = vadd.f32 %v436, %v450
      %v453 = vadd.f32 %v437, %v451
      %v454 = vld [vmem:[#allocation2 + $0x7] sm:$0xff]
      %v455 = vld [vmem:[#allocation2 + $0xf] sm:$0xff]
      %458 = vrot.lane.b32.xlu0 %v454, 126
      %v459 = vpop.permute.xlu0 %458
      %460 = vrot.lane.b32.xlu0 %v455, 126
      %v461 = vpop.permute.xlu0 %460
      %v464 = vsub.f32 %v454, %v459
      %v465 = vsub.f32 %v455, %v461
      %v466 = vadd.f32 %v452, %v464
      %v467 = vadd.f32 %v453, %v465
      %v468 = vmul.f32 %v426, 2.0
      %v469 = vmul.f32 %v427, 2.0
      %472 = vrot.lane.b32.xlu0 %v468, 127
      %v473 = vpop.permute.xlu0 %472
      %474 = vrot.lane.b32.xlu0 %v469, 127
      %v475 = vpop.permute.xlu0 %474
      %v478 = vadd.f32 %v426, %v473
      %v479 = vadd.f32 %v427, %v475
      %v480 = vadd.f32 %v478, %v431
      %v481 = vadd.f32 %v479, %v433
      %v482 = vmul.f32 %v454, 2.0
      %v483 = vmul.f32 %v455, 2.0
      %486 = vrot.lane.b32.xlu0 %v482, 127
      %v487 = vpop.permute.xlu0 %486
      %488 = vrot.lane.b32.xlu0 %v483, 127
      %v489 = vpop.permute.xlu0 %488
      %v492 = vadd.f32 %v454, %v487
      %v493 = vadd.f32 %v455, %v489
      %v494 = vadd.f32 %v492, %v459
      %v495 = vadd.f32 %v493, %v461
      %v496 = vsub.f32 %v480, %v494
      %v497 = vsub.f32 %v481, %v495
      %v498 = vld [vmem:[#allocation3] sm:$0xff]
      %v499 = vld [vmem:[#allocation3 + $0x8] sm:$0xff]
      %502 = vrot.lane.b32.xlu0 %v466, 123
      %v503 = vpop.permute.xlu0 %502
      %504 = vrot.lane.b32.xlu0 %v467, 123
      %v505 = vpop.permute.xlu0 %504
      %v508 = vadd.f32 %v498, %v503
      %v509 = vadd.f32 %v499, %v505
      %vm510 = vcmask 130048
      %511 = vst.msk [vmem:[#allocation3] sm:$0xff] %vm510, %v508
      %512 = vst.msk [vmem:[#allocation3 + $0x8] sm:$0xff] %vm510, %v509
      %v513 = vld [vmem:[#allocation4] sm:$0xff]
      %v514 = vld [vmem:[#allocation4 + $0x8] sm:$0xff]
      %517 = vrot.lane.b32.xlu0 %v496, 123
      %v518 = vpop.permute.xlu0 %517
      %519 = vrot.lane.b32.xlu0 %v497, 123
      %v520 = vpop.permute.xlu0 %519
      %v523 = vadd.f32 %v513, %v518
      %v524 = vadd.f32 %v514, %v520
      %525 = vst.msk [vmem:[#allocation4] sm:$0xff] %vm510, %v523
      %526 = vst.msk [vmem:[#allocation4 + $0x8] sm:$0xff] %vm510, %v524
      %v527 = vld [vmem:[%s177] sm:$0xff]
      %v528 = vld [vmem:[%s177 + $0x8] sm:$0xff]
      %v529 = vmul.f32 %v466, %v466
      %v530 = vmul.f32 %v467, %v467
      %v531 = vmul.f32 %v496, %v496
      %v532 = vmul.f32 %v497, %v497
      %v533 = vadd.f32 %v529, %v531
      %v534 = vadd.f32 %v530, %v532
      %v535 = vrsqrt.pop %v533
      %v536 = vmul.f32 %v533, %v535
      %vm537 = vcmp.eq.f32.partialorder %v533, inf
      %v538 = vsel %vm537, %v533, %v536
      %vm539 = vcmp.eq.f32.partialorder %v533, 0.0
      %v540 = vand.u32 %v533, 2147483648
      %v541 = vsel %vm539, %v540, %v538
      %v542 = vrsqrt.pop %v534
      %v543 = vmul.f32 %v534, %v542
      %vm544 = vcmp.eq.f32.partialorder %v534, inf
      %v545 = vsel %vm544, %v534, %v543
      %vm546 = vcmp.eq.f32.partialorder %v534, 0.0
      %v547 = vand.u32 %v534, 2147483648
      %v548 = vsel %vm546, %v547, %v545
      %551 = vrot.lane.b32.xlu0 %v541, 123
      %v552 = vpop.permute.xlu0 %551
      %553 = vrot.lane.b32.xlu0 %v548, 123
      %v554 = vpop.permute.xlu0 %553
      %v557 = vadd.f32 %v527, %v552
      %v558 = vadd.f32 %v528, %v554
      %559 = vst.msk [vmem:[%s177] sm:$0xff] %vm510, %v557
      %560 = vst.msk [vmem:[%s177 + $0x8] sm:$0xff] %vm510, %v558
      %p561 = scmp.eq.s32.totalorder %s19, 3
      // Predicated region
      $region29: #{canny_detector.2} parent=23 // pred_check
        %p562 = pneg %p561
      $region30: #{canny_detector.2} parent=23 // pred_check_branch
        %564 = sbr.rel (%p562) target = $region32
      $region31: #{canny_detector.2} parent=23 // pred_region
        %v565 = vld [vmem:[#allocation3] sm:$0xff]
        %v566 = vld [vmem:[#allocation3 + $0x8] sm:$0xff]
        %v567 = vld [vmem:[#allocation4] sm:$0xff]
        %v568 = vld [vmem:[#allocation4 + $0x8] sm:$0xff]
        %v569 = vand.u32 2147483647, %v565
        %v570 = vand.u32 2147483647, %v566
        %v571 = vand.u32 2147483647, %v567
        %v572 = vand.u32 2147483647, %v568
        %v573 = vmul.f32 %v569, 0.41421357
        %v574 = vmul.f32 %v570, 0.41421357
        %vm575 = vcmp.lt.f32.partialorder %v571, %v573
        %vm576 = vcmp.lt.f32.partialorder %v572, %v574
        %v577 = vmul.f32 %v569, 2.4142137
        %v578 = vmul.f32 %v570, 2.4142137
        %vm579 = vcmp.gt.f32.partialorder %v571, %v577
        %vm580 = vcmp.gt.f32.partialorder %v572, %v578
        %vm581 = vcmp.gt.f32.partialorder %v565, 0.0
        %vm582 = vcmp.gt.f32.partialorder %v566, 0.0
        %vm583 = vcmp.gt.f32.partialorder %v567, 0.0
        %vm584 = vcmp.gt.f32.partialorder %v568, 0.0
        %v585 = vsel %vm583, 5, 3
        %v586 = vsel %vm584, 5, 3
        %v587 = vsel %vm583, 7, 1
        %v588 = vsel %vm584, 7, 1
        %v589 = vsel %vm581, %v585, %v587
        %v590 = vsel %vm582, %v586, %v588
        %v591 = vsel %vm581, 4, 0
        %v592 = vsel %vm582, 4, 0
        %v593 = vsel %vm583, 6, 2
        %v594 = vsel %vm584, 6, 2
        %v595 = vsel %vm579, %v593, %v589
        %v596 = vsel %vm580, %v594, %v590
        %v597 = vsel %vm575, %v591, %v595
        %v598 = vsel %vm576, %v592, %v596
        %vm599 = vcmp.eq.f32.partialorder %v565, 0.0
        %vm600 = vcmp.eq.f32.partialorder %v566, 0.0
        %vm601 = vcmp.eq.f32.partialorder %v567, 0.0
        %vm602 = vcmp.eq.f32.partialorder %v568, 0.0
        %vm603 = vmand %vm599, %vm601
        %vm604 = vmand %vm600, %vm602
        %v605 = vsel %vm603, 4, %v597
        %v606 = vsel %vm604, 4, %v598
        %v607 = vpack.c.b16 %v605, %v605
        %v608 = vpack.c.b8 %v607, %v607
        %v609 = vpack.c.b16 %v606, %v606
        %v610 = vpack.c.b8 %v609, %v609
        %vm611 = vcmask 123904
        %612 = vst.msk [vmem:[%s182] sm:$0x3] %vm611, %v608
        %613 = vst.msk [vmem:[%s182 + $0x2] sm:$0x3] %vm611, %v610
      $region32: #{canny_detector.2} parent=23 // pred_fallthru
        _
      %p614 = scmp.lt.s32.totalorder %s18, 1
      %s615 = scalar_select %p614, %s18, 1
      %s616 = smul.addr %s615, 2
      %s617 = smul.addr %s616, 8
      %s618 = scalar_lea.vmem %s1, %s617
      %p619 = scmp.lt.s32.totalorder %s18, 1
      %s620 = scalar_select %p619, %s18, 1
      %s621 = smul.addr %s620, 2
      %s622 = smul.addr %s621, 2
      %s623 = scalar_lea.vmem %s2, %s622
      // Predicated region
      $region33: #{canny_detector.2} parent=23 // pred_check
        %p624 = pneg %p72
      $region34: #{canny_detector.2} parent=23 // pred_check_branch
        %626 = sbr.rel (%p624) target = $region36
      $region35: #{canny_detector.2} parent=23 // pred_region
        _
      $region36: #{canny_detector.2} parent=23 // pred_fallthru
        _
      // Predicated region
      $region37: #{canny_detector.2} parent=23 // pred_check
        %p627 = pneg %p98
      $region38: #{canny_detector.2} parent=23 // pred_check_branch
        %629 = sbr.rel (%p627) target = $region40
      $region39: #{canny_detector.2} parent=23 // pred_region
        _
      $region40: #{canny_detector.2} parent=23 // pred_fallthru
        _
    $region24: #{canny_detector.2} parent=5 // pred_fallthru
      _
    %p630 = scmp.le.s32.totalorder 2, %s9
    // Predicated region
    $region41: #{canny_detector.2} parent=5 // pred_check
      %p631 = pneg %p630
    $region42: #{canny_detector.2} parent=5 // pred_check_branch
      %633 = sbr.rel (%p631) target = $region44
    $region43: #{canny_detector.2} parent=5 // pred_region
      %s634 = ssub.s32 %s9, 2
      // Predicated region
      $region45: #{canny_detector.2} parent=43 // pred_check
        %p635 = pneg %p78
      $region46: #{canny_detector.2} parent=43 // pred_check_branch
        %637 = sbr.rel (%p635) target = $region48
      $region47: #{canny_detector.2} parent=43 // pred_region
        %p638 = scmp.lt.s32.totalorder %s20, 1
        %s639 = scalar_select %p638, %s20, 1
        %s640 = smul.addr %s639, 2
        %s641 = smul.addr %s640, 8
        %s642 = scalar_lea.vmem %s1, %s641
      $region48: #{canny_detector.2} parent=43 // pred_fallthru
        _
      // Predicated region
      $region49: #{canny_detector.2} parent=43 // pred_check
        %p643 = pneg %p104
      $region50: #{canny_detector.2} parent=43 // pred_check_branch
        %645 = sbr.rel (%p643) target = $region52
      $region51: #{canny_detector.2} parent=43 // pred_region
        %p646 = scmp.lt.s32.totalorder %s20, 1
        %s647 = scalar_select %p646, %s20, 1
        %s648 = smul.addr %s647, 2
        %s649 = smul.addr %s648, 2
        %s650 = scalar_lea.vmem %s2, %s649
      $region52: #{canny_detector.2} parent=43 // pred_fallthru
        _
    $region44: #{canny_detector.2} parent=5 // pred_fallthru
      _
  $region6: #{canny_detector.2} parent=0 // loop_footer
    %s13 = sadd.s32 1, %s9
  $region7: #{canny_detector.2} parent=0 // loop_footer_branch
    %8 = sbr.rel target = $region3
  $region8: #{canny_detector.2} parent=0 // loop_exit
    _

// kernel: canny_detector.3
$region0: #{canny_detector.3}
  #allocation0 [shape = 'u32[]', space=smem, size = 0x4, offset = 0x4, fixed_abs, tag = 'smem constant byte address 0x4 - core index']
  #allocation1 [shape = 'u32[144,128]{1,0:T(1,128)}', space=vmem, size = 0x12000, scoped, tag = 'internal scratch']
  #allocation2 [shape = 'f32[2,18,18]{2,1,0:T(8,128)}', space=vmem, size = 0x6000, scoped, tag = 'scratch operand']
  #allocation3 [shape = 'f32[18,18]{1,0:T(8,128)}', space=vmem, size = 0x3000, scoped, tag = 'scratch operand']
  %s0 = inlined_call_operand.vmem [shape: f32[2], index: 0, kind: input, shape index: {}]
  %s1 = inlined_call_operand.vmem [shape: f32[2,16,16], index: 1, kind: input, shape index: {}]
  %s2 = inlined_call_operand.vmem [shape: s8[2,16,16], index: 2, kind: input, shape index: {}]
  %s3 = inlined_call_operand.hbm [shape: f32[2,1,16,16], index: 3, kind: output, shape index: {}]
  %s4 = sld [smem:[#allocation0]]
  $region26: #{canny_detector.3} parent=0
    _
  %s6 = ssub.s32 1, %s4
  %s7 = scalar_select 0, %s6, %s4
  $region1: #{canny_detector.3} parent=0
    #allocation4 [shape = 'u8[512]{0}', space=smem, size = 0x200, scoped, tag = 'input window, operand 0, single buffered']
    #allocation5 [shape = 's32[1]{0}', space=sflag, size = 0x4, scoped, tag = 'scoped memory for canny_detector.3']
    #allocation6 [shape = 's32[1]{0}', space=sflag, size = 0x4, scoped, tag = 'scoped memory for canny_detector.3']
    #allocation7 [shape = 'u8[16384]{0}', space=vmem, size = 0x4000, scoped, tag = 'output window, operand 0, single buffered']
    %8 = vsyncpa [#allocation6], 0
    %9 = vsyncpa [#allocation5], 0
    // Predicated region
    $region2: #{canny_detector.3} parent=1 // pred_check
      _
    $region3: #{canny_detector.3} parent=1 // pred_check_branch
      %11 = sbr.rel (0) target = $region5
    $region4: #{canny_detector.3} parent=1 // pred_region
      %s13 = ssub.s32 16, 16
      %14 = vsyncadd [#allocation6], %s13
      %s16 = sshll.u32 %s0, 4
      %s17 = int_to_ptr.vmem [resolvable:$true] %s16
      %19 = dma.vmem_to_smem %s17, 16, [#allocation4], [#allocation6]
    $region5: #{canny_detector.3} parent=1 // pred_fallthru
      _
    // Predicated region
    $region6: #{canny_detector.3} parent=1 // pred_check
      _
    $region7: #{canny_detector.3} parent=1 // pred_check_branch
      %21 = sbr.rel (0) target = $region9
    $region8: #{canny_detector.3} parent=1 // pred_region
      _
    $region9: #{canny_detector.3} parent=1 // pred_fallthru
      _
    // Predicated region
    $region10: #{canny_detector.3} parent=1 // pred_check
      _
    $region11: #{canny_detector.3} parent=1 // pred_check_branch
      %23 = sbr.rel (0) target = $region13
    $region12: #{canny_detector.3} parent=1 // pred_region
      _
    $region13: #{canny_detector.3} parent=1 // pred_fallthru
      _
    // Predicated region
    $region14: #{canny_detector.3} parent=1 // pred_check
      _
    $region15: #{canny_detector.3} parent=1 // pred_check_branch
      %25 = sbr.rel (0) target = $region17
    $region16: #{canny_detector.3} parent=1 // pred_region
      %26 = dma.done [#allocation6], 16
    $region17: #{canny_detector.3} parent=1 // pred_fallthru
      _
    %27 = sfence
    %s28 = sld [smem:[#allocation4]]
    %s29 = sld [smem:[#allocation4 + $0x1]]
    %vm30 = vcmask 139264
    %31 = vst.msk [vmem:[#allocation2] sm:$0x1] %vm30, 0.0
    %32 = vst.msk [vmem:[#allocation2 + $0x11] sm:$0x1] %vm30, 0.0
    %vm33 = vcmask 7168
    %34 = vst.msk [vmem:[#allocation2] sm:$0xff] %vm33, 0.0
    %35 = vst.msk [vmem:[#allocation2 + $0x8] sm:$0xff] %vm33, 0.0
    %vm36 = vcmask 1024
    %37 = vst.msk [vmem:[#allocation2 + $0x10] sm:$0x3] %vm36, 0.0
    %vm38 = vcmask 146568
    %39 = vst.msk [vmem:[#allocation2] sm:$0xff] %vm38, 0.0
    %40 = vst.msk [vmem:[#allocation2 + $0x8] sm:$0xff] %vm38, 0.0
    %vm41 = vcmask 140424
    %42 = vst.msk [vmem:[#allocation2 + $0x10] sm:$0x3] %vm41, 0.0
    %v43 = vld [vmem:[%s1] sm:$0xff]
    %v44 = vld [vmem:[%s1 + $0x8] sm:$0xff]
    %47 = vrot.lane.b32.xlu0 %v43, 1
    %v48 = vpop.permute.xlu0 %47
    %49 = vrot.lane.b32.xlu0 %v44, 1
    %v50 = vpop.permute.xlu0 %49
    %vm53 = vcmask 138248
    %54 = vst.msk [vmem:[#allocation2 + $0x1] sm:$0xff] %vm53, %v48
    %55 = vst.msk [vmem:[#allocation2 + $0x9] sm:$0xff] %vm53, %v50
    %s56 = scalar_lea.vmem [#allocation2], 24
    %57 = vst.msk [vmem:[%s56] sm:$0x1] %vm30, 0.0
    %58 = vst.msk [vmem:[%s56 + $0x11] sm:$0x1] %vm30, 0.0
    %59 = vst.msk [vmem:[%s56] sm:$0xff] %vm33, 0.0
    %60 = vst.msk [vmem:[%s56 + $0x8] sm:$0xff] %vm33, 0.0
    %61 = vst.msk [vmem:[%s56 + $0x10] sm:$0x3] %vm36, 0.0
    %62 = vst.msk [vmem:[%s56] sm:$0xff] %vm38, 0.0
    %63 = vst.msk [vmem:[%s56 + $0x8] sm:$0xff] %vm38, 0.0
    %64 = vst.msk [vmem:[%s56 + $0x10] sm:$0x3] %vm41, 0.0
    %s65 = scalar_lea.vmem %s1, 16
    %v66 = vld [vmem:[%s65] sm:$0xff]
    %v67 = vld [vmem:[%s65 + $0x8] sm:$0xff]
    %70 = vrot.lane.b32.xlu0 %v66, 1
    %v71 = vpop.permute.xlu0 %70
    %72 = vrot.lane.b32.xlu0 %v67, 1
    %v73 = vpop.permute.xlu0 %72
    %76 = vst.msk [vmem:[%s56 + $0x1] sm:$0xff] %vm53, %v71
    %77 = vst.msk [vmem:[%s56 + $0x9] sm:$0xff] %vm53, %v73
    %78 = vst.msk [vmem:[#allocation3] sm:$0x1] %vm30, 0.0
    %79 = vst.msk [vmem:[#allocation3 + $0x11] sm:$0x1] %vm30, 0.0
    %80 = vst.msk [vmem:[#allocation3] sm:$0xff] %vm33, 0.0
    %81 = vst.msk [vmem:[#allocation3 + $0x8] sm:$0xff] %vm33, 0.0
    %82 = vst.msk [vmem:[#allocation3 + $0x10] sm:$0x3] %vm36, 0.0
    %83 = vst.msk [vmem:[#allocation3] sm:$0xff] %vm38, 0.0
    %84 = vst.msk [vmem:[#allocation3 + $0x8] sm:$0xff] %vm38, 0.0
    %85 = vst.msk [vmem:[#allocation3 + $0x10] sm:$0x3] %vm41, 0.0
    %v86 = vld [vmem:[%s2] sm:$0x3]
    %v87 = vld [vmem:[%s2 + $0x2] sm:$0x3]
    %v88 = vld [vmem:[%s2 + $0x4] sm:$0x3]
    %v89 = vld [vmem:[%s2 + $0x6] sm:$0x3]
    %v90 = vunpack.c.0.s8 %v86
    %v91 = vunpack.c.0.s8 %v87
    %v92 = vunpack.c.0.s8 %v88
    %v93 = vunpack.c.0.s8 %v89
    %v94 = vlaneseq
    %v95 = vshrl.u32 %v94, 7
    %v96 = vadd.s32 %v95, 8
    %v97 = vlaneseq
    %v98 = vand.u32 %v97, 127
    %vm99 = vcmp.gt.s32.totalorder %v95, 0
    %vm100 = vcmp.gt.s32.totalorder %v96, 0
    %vm101 = vcmp.lt.s32.totalorder %v95, 15
    %vm102 = vcmp.lt.s32.totalorder %v96, 15
    %vm103 = vmand %vm99, %vm101
    %vm104 = vmand %vm100, %vm102
    %vm105 = vcmp.gt.s32.totalorder %v98, 0
    %vm106 = vmand %vm103, %vm105
    %vm107 = vmand %vm104, %vm105
    %vm108 = vcmp.lt.s32.totalorder %v98, 15
    %vm109 = vmand %vm106, %vm108
    %vm110 = vmand %vm107, %vm108
    %v111 = vld [vmem:[%s1] sm:$0xff]
    %v112 = vld [vmem:[%s1 + $0x8] sm:$0xff]
    %v113 = vld [vmem:[#allocation2 + $0x1] sm:$0xff]
    %v114 = vld [vmem:[#allocation2 + $0x9] sm:$0xff]
    %117 = vrot.lane.b32.xlu0 %v113, 126
    %v118 = vpop.permute.xlu0 %117
    %119 = vrot.lane.b32.xlu0 %v114, 126
    %v120 = vpop.permute.xlu0 %119
    %v123 = vsub.f32 %v111, %v118
    %v124 = vsub.f32 %v112, %v120
    %vm125 = vcmp.eq.s32.totalorder %v90, 0
    %vm126 = vcmp.eq.s32.totalorder %v91, 0
    %v127 = vsel %vm125, %v123, 0.0
    %v128 = vsel %vm126, %v124, 0.0
    %v129 = vadd.f32 %v127, 0.0
    %v130 = vadd.f32 %v128, 0.0
    %vm131 = vcmp.eq.s32.totalorder %v90, 4
    %vm132 = vcmp.eq.s32.totalorder %v91, 4
    %v133 = vsel %vm131, %v123, 0.0
    %v134 = vsel %vm132, %v124, 0.0
    %v135 = vadd.f32 %v133, 0.0
    %v136 = vadd.f32 %v134, 0.0
    %v137 = vld [vmem:[#allocation2 + $0x2] sm:$0xff]
    %v138 = vld [vmem:[#allocation2 + $0xa] sm:$0xff]
    %141 = vrot.lane.b32.xlu0 %v137, 127
    %v142 = vpop.permute.xlu0 %141
    %143 = vrot.lane.b32.xlu0 %v138, 127
    %v144 = vpop.permute.xlu0 %143
    %v147 = vsub.f32 %v111, %v142
    %v148 = vsub.f32 %v112, %v144
    %vm149 = vcmp.eq.s32.totalorder %v90, 1
    %vm150 = vcmp.eq.s32.totalorder %v91, 1
    %v151 = vsel %vm149, %v147, 0.0
    %v152 = vsel %vm150, %v148, 0.0
    %v153 = vadd.f32 %v129, %v151
    %v154 = vadd.f32 %v130, %v152
    %vm155 = vcmp.eq.s32.totalorder %v90, 5
    %vm156 = vcmp.eq.s32.totalorder %v91, 5
    %v157 = vsel %vm155, %v147, 0.0
    %v158 = vsel %vm156, %v148, 0.0
    %v159 = vadd.f32 %v135, %v157
    %v160 = vadd.f32 %v136, %v158
    %v161 = vsub.f32 %v111, %v113
    %v162 = vsub.f32 %v112, %v114
    %vm163 = vcmp.eq.s32.totalorder %v90, 2
    %vm164 = vcmp.eq.s32.totalorder %v91, 2
    %v165 = vsel %vm163, %v161, 0.0
    %v166 = vsel %vm164, %v162, 0.0
    %v167 = vadd.f32 %v153, %v165
    %v168 = vadd.f32 %v154, %v166
    %vm169 = vcmp.eq.s32.totalorder %v90, 6
    %vm170 = vcmp.eq.s32.totalorder %v91, 6
    %v171 = vsel %vm169, %v161, 0.0
    %v172 = vsel %vm170, %v162, 0.0
    %v173 = vadd.f32 %v159, %v171
    %v174 = vadd.f32 %v160, %v172
    %v175 = vld [vmem:[#allocation2] sm:$0xff]
    %v176 = vld [vmem:[#allocation2 + $0x8] sm:$0xff]
    %179 = vrot.lane.b32.xlu0 %v175, 127
    %v180 = vpop.permute.xlu0 %179
    %181 = vrot.lane.b32.xlu0 %v176, 127
    %v182 = vpop.permute.xlu0 %181
    %v185 = vsub.f32 %v111, %v180
    %v186 = vsub.f32 %v112, %v182
    %vm187 = vcmp.eq.s32.totalorder %v90, 3
    %vm188 = vcmp.eq.s32.totalorder %v91, 3
    %v189 = vsel %vm187, %v185, 0.0
    %v190 = vsel %vm188, %v186, 0.0
    %v191 = vadd.f32 %v167, %v189
    %v192 = vadd.f32 %v168, %v190
    %vm193 = vcmp.eq.s32.totalorder %v90, 7
    %vm194 = vcmp.eq.s32.totalorder %v91, 7
    %v195 = vsel %vm193, %v185, 0.0
    %v196 = vsel %vm194, %v186, 0.0
    %v197 = vadd.f32 %v173, %v195
    %v198 = vadd.f32 %v174, %v196
    %v199 = vld [vmem:[%s65] sm:$0xff]
    %v200 = vld [vmem:[%s65 + $0x8] sm:$0xff]
    %v201 = vld [vmem:[%s56 + $0x1] sm:$0xff]
    %v202 = vld [vmem:[%s56 + $0x9] sm:$0xff]
    %205 = vrot.lane.b32.xlu0 %v201, 126
    %v206 = vpop.permute.xlu0 %205
    %207 = vrot.lane.b32.xlu0 %v202, 126
    %v208 = vpop.permute.xlu0 %207
    %v211 = vsub.f32 %v199, %v206
    %v212 = vsub.f32 %v200, %v208
    %v213 = vsel %vm131, %v211, 0.0
    %v214 = vsel %vm132, %v212, 0.0
    %v215 = vadd.f32 %v191, %v213
    %v216 = vadd.f32 %v192, %v214
    %v217 = vsel %vm125, %v211, 0.0
    %v218 = vsel %vm126, %v212, 0.0
    %v219 = vadd.f32 %v197, %v217
    %v220 = vadd.f32 %v198, %v218
    %v221 = vld [vmem:[%s56 + $0x2] sm:$0xff]
    %v222 = vld [vmem:[%s56 + $0xa] sm:$0xff]
    %225 = vrot.lane.b32.xlu0 %v221, 127
    %v226 = vpop.permute.xlu0 %225
    %227 = vrot.lane.b32.xlu0 %v222, 127
    %v228 = vpop.permute.xlu0 %227
    %v231 = vsub.f32 %v199, %v226
    %v232 = vsub.f32 %v200, %v228
    %v233 = vsel %vm155, %v231, 0.0
    %v234 = vsel %vm156, %v232, 0.0
    %v235 = vadd.f32 %v215, %v233
    %v236 = vadd.f32 %v216, %v234
    %v237 = vsel %vm149, %v231, 0.0
    %v238 = vsel %vm150, %v232, 0.0
    %v239 = vadd.f32 %v219, %v237
    %v240 = vadd.f32 %v220, %v238
    %v241 = vsub.f32 %v199, %v201
    %v242 = vsub.f32 %v200, %v202
    %v243 = vsel %vm169, %v241, 0.0
    %v244 = vsel %vm170, %v242, 0.0
    %v245 = vadd.f32 %v235, %v243
    %v246 = vadd.f32 %v236, %v244
    %v247 = vsel %vm163, %v241, 0.0
    %v248 = vsel %vm164, %v242, 0.0
    %v249 = vadd.f32 %v239, %v247
    %v250 = vadd.f32 %v240, %v248
    %v251 = vld [vmem:[%s56] sm:$0xff]
    %v252 = vld [vmem:[%s56 + $0x8] sm:$0xff]
    %255 = vrot.lane.b32.xlu0 %v251, 127
    %v256 = vpop.permute.xlu0 %255
    %257 = vrot.lane.b32.xlu0 %v252, 127
    %v258 = vpop.permute.xlu0 %257
    %v261 = vsub.f32 %v199, %v256
    %v262 = vsub.f32 %v200, %v258
    %v263 = vsel %vm193, %v261, 0.0
    %v264 = vsel %vm194, %v262, 0.0
    %v265 = vadd.f32 %v245, %v263
    %v266 = vadd.f32 %v246, %v264
    %v267 = vsel %vm187, %v261, 0.0
    %v268 = vsel %vm188, %v262, 0.0
    %v269 = vadd.f32 %v249, %v267
    %v270 = vadd.f32 %v250, %v268
    %v271 = vmin.f32 %v265, %v269
    %v272 = vmin.f32 %v266, %v270
    %vm273 = vcmp.gt.f32.partialorder %v271, 0.0
    %vm274 = vcmp.gt.f32.partialorder %v272, 0.0
    %v275 = vsel %vm273, %v111, 0.0
    %v276 = vsel %vm274, %v112, 0.0
    %v277 = vstv %s29
    %vm278 = vcmp.gt.f32.partialorder %v275, %v277
    %vm279 = vcmp.gt.f32.partialorder %v276, %v277
    %v280 = vsel %vm278, 1, 0
    %v281 = vsel %vm279, 1, 0
    %v282 = vcvt.s32.f32 %v280
    %v283 = vcvt.s32.f32 %v281
    %286 = vrot.lane.b32.xlu0 %v282, 1
    %v287 = vpop.permute.xlu0 %286
    %288 = vrot.lane.b32.xlu0 %v283, 1
    %v289 = vpop.permute.xlu0 %288
    %292 = vst.msk [vmem:[#allocation3 + $0x1] sm:$0xff] %vm53, %v287
    %293 = vst.msk [vmem:[#allocation3 + $0x9] sm:$0xff] %vm53, %v289
    %v294 = vld [vmem:[#allocation3] sm:$0xff]
    %v295 = vld [vmem:[#allocation3 + $0x8] sm:$0xff]
    %v296 = vadd.f32 %v294, 0.0
    %v297 = vadd.f32 %v295, 0.0
    %300 = vrot.lane.b32.xlu0 %v294, 127
    %v301 = vpop.permute.xlu0 %300
    %302 = vrot.lane.b32.xlu0 %v295, 127
    %v303 = vpop.permute.xlu0 %302
    %v306 = vadd.f32 %v296, %v301
    %v307 = vadd.f32 %v297, %v303
    %308 = vrot.lane.b32.xlu0 %v294, 126
    %v309 = vpop.permute.xlu0 %308
    %310 = vrot.lane.b32.xlu0 %v295, 126
    %v311 = vpop.permute.xlu0 %310
    %v314 = vadd.f32 %v306, %v309
    %v315 = vadd.f32 %v307, %v311
    %v316 = vld [vmem:[#allocation3 + $0x1] sm:$0xff]
    %v317 = vld [vmem:[#allocation3 + $0x9] sm:$0xff]
    %v318 = vadd.f32 %v314, %v316
    %v319 = vadd.f32 %v315, %v317
    %322 = vrot.lane.b32.xlu0 %v316, 126
    %v323 = vpop.permute.xlu0 %322
    %324 = vrot.lane.b32.xlu0 %v317, 126
    %v325 = vpop.permute.xlu0 %324
    %v328 = vadd.f32 %v318, %v323
    %v329 = vadd.f32 %v319, %v325
    %v330 = vld [vmem:[#allocation3 + $0x2] sm:$0xff]
    %v331 = vld [vmem:[#allocation3 + $0xa] sm:$0xff]
    %v332 = vadd.f32 %v328, %v330
    %v333 = vadd.f32 %v329, %v331
    %336 = vrot.lane.b32.xlu0 %v330, 127
    %v337 = vpop.permute.xlu0 %336
    %338 = vrot.lane.b32.xlu0 %v331, 127
    %v339 = vpop.permute.xlu0 %338
    %v342 = vadd.f32 %v332, %v337
    %v343 = vadd.f32 %v333, %v339
    %344 = vrot.lane.b32.xlu0 %v330, 126
    %v345 = vpop.permute.xlu0 %344
    %346 = vrot.lane.b32.xlu0 %v331, 126
    %v347 = vpop.permute.xlu0 %346
    %v350 = vadd.f32 %v342, %v345
    %v351 = vadd.f32 %v343, %v347
    %v352 = vstv %s28
    %vm353 = vcmp.ge.f32.partialorder %v275, %v352
    %vm354 = vcmp.ge.f32.partialorder %v276, %v352
    %vm355 = vcmp.le.f32.partialorder %v275, %v277
    %vm356 = vcmp.le.f32.partialorder %v276, %v277
    %vm357 = vmand %vm353, %vm355
    %vm358 = vmand %vm354, %vm356
    %vm359 = vcmp.gt.f32.partialorder %v350, 0.0
    %vm360 = vcmp.gt.f32.partialorder %v351, 0.0
    %vm361 = vmand %vm357, %vm359
    %vm362 = vmand %vm358, %vm360
    %vm363 = vmor %vm278, %vm361
    %vm364 = vmor %vm279, %vm362
    %vm365 = vmand %vm363, %vm109
    %vm366 = vmand %vm364, %vm110
    %v367 = vsel %vm365, 1, 0
    %v368 = vsel %vm366, 1, 0
    %v369 = vcvt.s32.f32 %v367
    %v370 = vcvt.s32.f32 %v368
    %vm371 = vcmask 130048
    %372 = vst.msk [vmem:[#allocation7] sm:$0xff] %vm371, %v369
    %373 = vst.msk [vmem:[#allocation7 + $0x8] sm:$0xff] %vm371, %v370
    %v374 = vld [vmem:[%s1] sm:$0xff]
    %v375 = vld [vmem:[%s1 + $0x8] sm:$0xff]
    %v376 = vld [vmem:[#allocation2 + $0x2] sm:$0xff]
    %v377 = vld [vmem:[#allocation2 + $0xa] sm:$0xff]
    %380 = vrot.lane.b32.xlu0 %v376, 126
    %v381 = vpop.permute.xlu0 %380
    %382 = vrot.lane.b32.xlu0 %v377, 126
    %v383 = vpop.permute.xlu0 %382
    %v386 = vsub.f32 %v374, %v381
    %v387 = vsub.f32 %v375, %v383
    %vm388 = vcmp.eq.s32.totalorder %v92, 0
    %vm389 = vcmp.eq.s32.totalorder %v93, 0
    %v390 = vsel %vm388, %v386, 0.0
    %v391 = vsel %vm389, %v387, 0.0
    %v392 = vadd.f32 %v390, 0.0
    %v393 = vadd.f32 %v391, 0.0
    %vm394 = vcmp.eq.s32.totalorder %v92, 4
    %vm395 = vcmp.eq.s32.totalorder %v93, 4
    %v396 = vsel %vm394, %v386, 0.0
    %v397 = vsel %vm395, %v387, 0.0
    %v398 = vadd.f32 %v396, 0.0
    %v399 = vadd.f32 %v397, 0.0
    %v400 = vsub.f32 %v374, %v376
    %v401 = vsub.f32 %v375, %v377
    %vm402 = vcmp.eq.s32.totalorder %v92, 1
    %vm403 = vcmp.eq.s32.totalorder %v93, 1
    %v404 = vsel %vm402, %v400, 0.0
    %v405 = vsel %vm403, %v401, 0.0
    %v406 = vadd.f32 %v392, %v404
    %v407 = vadd.f32 %v393, %v405
    %vm408 = vcmp.eq.s32.totalorder %v92, 5
    %vm409 = vcmp.eq.s32.totalorder %v93, 5
    %v410 = vsel %vm408, %v400, 0.0
    %v411 = vsel %vm409, %v401, 0.0
    %v412 = vadd.f32 %v398, %v410
    %v413 = vadd.f32 %v399, %v411
    %v414 = vld [vmem:[#allocation2] sm:$0xff]
    %v415 = vld [vmem:[#allocation2 + $0x8] sm:$0xff]
    %v416 = vsub.f32 %v374, %v414
    %v417 = vsub.f32 %v375, %v415
    %vm418 = vcmp.eq.s32.totalorder %v92, 2
    %vm419 = vcmp.eq.s32.totalorder %v93, 2
    %v420 = vsel %vm418, %v416, 0.0
    %v421 = vsel %vm419, %v417, 0.0
    %v422 = vadd.f32 %v406, %v420
    %v423 = vadd.f32 %v407, %v421
    %vm424 = vcmp.eq.s32.totalorder %v92, 6
    %vm425 = vcmp.eq.s32.totalorder %v93, 6
    %v426 = vsel %vm424, %v416, 0.0
    %v427 = vsel %vm425, %v417, 0.0
    %v428 = vadd.f32 %v412, %v426
    %v429 = vadd.f32 %v413, %v427
    %432 = vrot.lane.b32.xlu0 %v414, 126
    %v433 = vpop.permute.xlu0 %432
    %434 = vrot.lane.b32.xlu0 %v415, 126
    %v435 = vpop.permute.xlu0 %434
    %v438 = vsub.f32 %v374, %v433
    %v439 = vsub.f32 %v375, %v435
    %vm440 = vcmp.eq.s32.totalorder %v92, 3
    %vm441 = vcmp.eq.s32.totalorder %v93, 3
    %v442 = vsel %vm440, %v438, 0.0
    %v443 = vsel %vm441, %v439, 0.0
    %v444 = vadd.f32 %v422, %v442
    %v445 = vadd.f32 %v423, %v443
    %vm446 = vcmp.eq.s32.totalorder %v92, 7
    %vm447 = vcmp.eq.s32.totalorder %v93, 7
    %v448 = vsel %vm446, %v438, 0.0
    %v449 = vsel %vm447, %v439, 0.0
    %v450 = vadd.f32 %v428, %v448
    %v451 = vadd.f32 %v429, %v449
    %v452 = vld [vmem:[%s65] sm:$0xff]
    %v453 = vld [vmem:[%s65 + $0x8] sm:$0xff]
    %v454 = vld [vmem:[%s56 + $0x2] sm:$0xff]
    %v455 = vld [vmem:[%s56 + $0xa] sm:$0xff]
    %458 = vrot.lane.b32.xlu0 %v454, 126
    %v459 = vpop.permute.xlu0 %458
    %460 = vrot.lane.b32.xlu0 %v455, 126
    %v461 = vpop.permute.xlu0 %460
    %v464 = vsub.f32 %v452, %v459
    %v465 = vsub.f32 %v453, %v461
    %v466 = vsel %vm394, %v464, 0.0
    %v467 = vsel %vm395, %v465, 0.0
    %v468 = vadd.f32 %v444, %v466
    %v469 = vadd.f32 %v445, %v467
    %v470 = vsel %vm388, %v464, 0.0
    %v471 = vsel %vm389, %v465, 0.0
    %v472 = vadd.f32 %v450, %v470
    %v473 = vadd.f32 %v451, %v471
    %v474 = vsub.f32 %v452, %v454
    %v475 = vsub.f32 %v453, %v455
    %v476 = vsel %vm408, %v474, 0.0
    %v477 = vsel %vm409, %v475, 0.0
    %v478 = vadd.f32 %v468, %v476
    %v479 = vadd.f32 %v469, %v477
    %v480 = vsel %vm402, %v474, 0.0
    %v481 = vsel %vm403, %v475, 0.0
    %v482 = vadd.f32 %v472, %v480
    %v483 = vadd.f32 %v473, %v481
    %v484 = vld [vmem:[%s56] sm:$0xff]
    %v485 = vld [vmem:[%s56 + $0x8] sm:$0xff]
    %v486 = vsub.f32 %v452, %v484
    %v487 = vsub.f32 %v453, %v485
    %v488 = vsel %vm424, %v486, 0.0
    %v489 = vsel %vm425, %v487, 0.0
    %v490 = vadd.f32 %v478, %v488
    %v491 = vadd.f32 %v479, %v489
    %v492 = vsel %vm418, %v486, 0.0
    %v493 = vsel %vm419, %v487, 0.0
    %v494 = vadd.f32 %v482, %v492
    %v495 = vadd.f32 %v483, %v493
    %498 = vrot.lane.b32.xlu0 %v484, 126
    %v499 = vpop.permute.xlu0 %498
    %500 = vrot.lane.b32.xlu0 %v485, 126
    %v501 = vpop.permute.xlu0 %500
    %v504 = vsub.f32 %v452, %v499
    %v505 = vsub.f32 %v453, %v501
    %v506 = vsel %vm446, %v504, 0.0
    %v507 = vsel %vm447, %v505, 0.0
    %v508 = vadd.f32 %v490, %v506
    %v509 = vadd.f32 %v491, %v507
    %v510 = vsel %vm440, %v504, 0.0
    %v511 = vsel %vm441, %v505, 0.0
    %v512 = vadd.f32 %v494, %v510
    %v513 = vadd.f32 %v495, %v511
    %v514 = vmin.f32 %v508, %v512
    %v515 = vmin.f32 %v509, %v513
    %vm516 = vcmp.gt.f32.partialorder %v514, 0.0
    %vm517 = vcmp.gt.f32.partialorder %v515, 0.0
    %v518 = vsel %vm516, %v452, 0.0
    %v519 = vsel %vm517, %v453, 0.0
    %vm520 = vcmp.gt.f32.partialorder %v518, %v277
    %vm521 = vcmp.gt.f32.partialorder %v519, %v277
    %v522 = vsel %vm520, 1, 0
    %v523 = vsel %vm521, 1, 0
    %v524 = vcvt.s32.f32 %v522
    %v525 = vcvt.s32.f32 %v523
    %528 = vrot.lane.b32.xlu0 %v524, 1
    %v529 = vpop.permute.xlu0 %528
    %530 = vrot.lane.b32.xlu0 %v525, 1
    %v531 = vpop.permute.xlu0 %530
    %534 = vst.msk [vmem:[#allocation3 + $0x1] sm:$0xff] %vm53, %v529
    %535 = vst.msk [vmem:[#allocation3 + $0x9] sm:$0xff] %vm53, %v531
    %v536 = vld [vmem:[#allocation3] sm:$0xff]
    %v537 = vld [vmem:[#allocation3 + $0x8] sm:$0xff]
    %v538 = vadd.f32 %v536, 0.0
    %v539 = vadd.f32 %v537, 0.0
    %542 = vrot.lane.b32.xlu0 %v536, 127
    %v543 = vpop.permute.xlu0 %542
    %544 = vrot.lane.b32.xlu0 %v537, 127
    %v545 = vpop.permute.xlu0 %544
    %v548 = vadd.f32 %v538, %v543
    %v549 = vadd.f32 %v539, %v545
    %550 = vrot.lane.b32.xlu0 %v536, 126
    %v551 = vpop.permute.xlu0 %550
    %552 = vrot.lane.b32.xlu0 %v537, 126
    %v553 = vpop.permute.xlu0 %552
    %v556 = vadd.f32 %v548, %v551
    %v557 = vadd.f32 %v549, %v553
    %v558 = vld [vmem:[#allocation3 + $0x1] sm:$0xff]
    %v559 = vld [vmem:[#allocation3 + $0x9] sm:$0xff]
    %v560 = vadd.f32 %v556, %v558
    %v561 = vadd.f32 %v557, %v559
    %564 = vrot.lane.b32.xlu0 %v558, 126
    %v565 = vpop.permute.xlu0 %564
    %566 = vrot.lane.b32.xlu0 %v559, 126
    %v567 = vpop.permute.xlu0 %566
    %v570 = vadd.f32 %v560, %v565
    %v571 = vadd.f32 %v561, %v567
    %v572 = vld [vmem:[#allocation3 + $0x2] sm:$0xff]
    %v573 = vld [vmem:[#allocation3 + $0xa] sm:$0xff]
    %v574 = vadd.f32 %v570, %v572
    %v575 = vadd.f32 %v571, %v573
    %578 = vrot.lane.b32.xlu0 %v572, 127
    %v579 = vpop.permute.xlu0 %578
    %580 = vrot.lane.b32.xlu0 %v573, 127
    %v581 = vpop.permute.xlu0 %580
    %v584 = vadd.f32 %v574, %v579
    %v585 = vadd.f32 %v575, %v581
    %586 = vrot.lane.b32.xlu0 %v572, 126
    %v587 = vpop.permute.xlu0 %586
    %588 = vrot.lane.b32.xlu0 %v573, 126
    %v589 = vpop.permute.xlu0 %588
    %v592 = vadd.f32 %v584, %v587
    %v593 = vadd.f32 %v585, %v589
    %vm594 = vcmp.ge.f32.partialorder %v518, %v352
    %vm595 = vcmp.ge.f32.partialorder %v519, %v352
    %vm596 = vcmp.le.f32.partialorder %v518, %v277
    %vm597 = vcmp.le.f32.partialorder %v519, %v277
    %vm598 = vmand %vm594, %vm596
    %vm599 = vmand %vm595, %vm597
    %vm600 = vcmp.gt.f32.partialorder %v592, 0.0
    %vm601 = vcmp.gt.f32.partialorder %v593, 0.0
    %vm602 = vmand %vm598, %vm600
    %vm603 = vmand %vm599, %vm601
    %vm604 = vmor %vm520, %vm602
    %vm605 = vmor %vm521, %vm603
    %vm606 = vmand %vm604, %vm109
    %vm607 = vmand %vm605, %vm110
    %v608 = vsel %vm606, 1, 0
    %v609 = vsel %vm607, 1, 0
    %v610 = vcvt.s32.f32 %v608
    %v611 = vcvt.s32.f32 %v609
    %s612 = scalar_lea.vmem [#allocation7], 16
    %613 = vst.msk [vmem:[%s612] sm:$0xff] %vm371, %v610
    %614 = vst.msk [vmem:[%s612 + $0x8] sm:$0xff] %vm371, %v611
    // Predicated region
    $region18: #{canny_detector.3} parent=1 // pred_check
      _
    $region19: #{canny_detector.3} parent=1 // pred_check_branch
      %616 = sbr.rel (0) target = $region21
    $region20: #{canny_detector.3} parent=1 // pred_region
      %s618 = ssub.s32 512, 512
      %619 = vsyncadd [#allocation5], %s618
      %s620 = sshll.u32 [#allocation7], 4
      %s621 = int_to_ptr.vmem [resolvable:$true] %s620
      %626 = dma.vmem_to_hbm [thread:$0]  %s621, 512, %s3, [#allocation5], 128, 128, 8
    $region21: #{canny_detector.3} parent=1 // pred_fallthru
      _
    // Predicated region
    $region22: #{canny_detector.3} parent=1 // pred_check
      _
    $region23: #{canny_detector.3} parent=1 // pred_check_branch
      %628 = sbr.rel (0) target = $region25
    $region24: #{canny_detector.3} parent=1 // pred_region
      %629 = dma.done [#allocation5], 512
    $region25: #{canny_detector.3} parent=1 // pred_fallthru
      _
    %630 = vsyncpa [#allocation5], 1
    %631 = vsyncpa [#allocation6], 1

</llo_original>
